<compile_context>
chip_gen: v7x
topology: tpu7x:2x2x1
jax: 0.10.0
libtpu: 0.0.40
codegen_flags: <defaults>
</compile_context>

<pallas_src>
import functools
import numpy as np

import jax
import jax.numpy as jnp
from jax import lax
from jax.experimental import pallas as pl
from jax.experimental.pallas import tpu as pltpu


# ----------------------------- helpers --------------------------------------

def _shift_rows(z, off, valid, P):
    """s[p] = z[p + off] where `valid[p]`, else 0.  f32 in / f32 out.

    Uses an XLU roll + select when P is sublane-aligned, otherwise a tiny 0/1
    selection-matrix matmul (only taken for the 2x2 bottleneck images).
    """
    if P % 8 == 0:
        s = pltpu.roll(z, shift=(-off) % P, axis=0)
        return jnp.where(valid, s, 0.0)
    r = lax.broadcasted_iota(jnp.int32, (P, P), 0)      # output position
    c = lax.broadcasted_iota(jnp.int32, (P, P), 1)      # source position
    sel = jnp.logical_and(c == r + off, valid)
    return jnp.dot(sel.astype(jnp.float32), z, preferred_element_type=jnp.float32)


def _pick_tile_rows(H, W, max_pt):
    """Largest divisor d of H with d*W <= max_pt (>= 1)."""
    best = 1
    for d in range(1, H + 1):
        if H % d == 0 and d * W <= max_pt:
            best = d
    return best


# ----------------------------- kernels --------------------------------------

def _conv_s1_kernel(*args, W, n_in, relu):
    """Stride-1 3x3 conv on one row-tile, channel-concat of n_in sources.

    Args per source: center (1,1,Pt,Ci) bf16, up-halo (1,1,W,Ci), dn-halo
    (1,1,W,Ci); then n_in weights (9,Ci,Cout) bf16; bias (1,Cout) f32;
    output (1,1,Pt,Cout).
    """
    c_refs = [args[3 * i] for i in range(n_in)]
    u_refs = [args[3 * i + 1] for i in range(n_in)]
    d_refs = [args[3 * i + 2] for i in range(n_in)]
    w_refs = [args[3 * n_in + i] for i in range(n_in)]
    b_ref = args[4 * n_in]
    o_ref = args[4 * n_in + 1]

    t = pl.program_id(1)
    T = pl.num_programs(1)
    Pt = o_ref.shape[2]
    cout = o_ref.shape[3]

    # Zero the halo rows at the image boundary (index_map clamps there).
    top = jnp.where(t == 0, 0.0, 1.0).astype(jnp.bfloat16)
    bot = jnp.where(t == T - 1, 0.0, 1.0).astype(jnp.bfloat16)

    # One f32 accumulator per dw group; each gets a clean dot-accumulate chain.
    accs = [jnp.zeros((Pt, cout), jnp.float32) for _ in range(3)]

    for i in range(n_in):
        x = c_refs[i][0, 0]                       # (Pt, Ci) bf16
        up = u_refs[i][0, 0] * top                # (W, Ci)
        dn = d_refs[i][0, 0] * bot
        if W % 8 == 0:
            # Aligned bf16 path: one concat, then the 3 dh planes are views.
            xa = jnp.concatenate([up, x, dn], axis=0)       # (Pt+2W, Ci)
            planes = [xa[k * W:k * W + Pt] for k in range(3)]
        else:
            # Tiny-image fallback (W in {2,4}): assemble/slice in f32.
            xaf = jnp.concatenate(
                [up.astype(jnp.float32), x.astype(jnp.float32),
                 dn.astype(jnp.float32)], axis=0)
            planes = [xaf[k * W:k * W + Pt].astype(jnp.bfloat16)
                      for k in range(3)]
        w = w_refs[i]
        for dwi in range(3):                      # dw = dwi - 1
            for dhi in range(3):                  # dh = dhi - 1
                accs[dwi] = accs[dwi] + jnp.dot(
                    planes[dhi], w[dhi * 3 + dwi],
                    preferred_element_type=jnp.float32)

    # Column (dw) shift applied once per group on the f32 accumulator.
    col = lax.broadcasted_iota(jnp.int32, (Pt, 1), 0) % W
    out = accs[1]
    out = out + _shift_rows(accs[0], -1, col >= 1, Pt)       # dw = -1
    out = out + _shift_rows(accs[2], 1, col <= W - 2, Pt)    # dw = +1
    out = out + b_ref[...]
    if relu:
        out = jnp.maximum(out, 0.0)
    o_ref[0, 0] = out.astype(o_ref.dtype)


def _conv_s2_kernel(c_ref, u_ref, w_ref, b_ref, o_ref, *, Wo, relu):
    """Stride-2 3x3 conv on one output row-tile, from 4 parity planes.

    c_ref: (1,4,1,Pot,Cin) parity planes [ph*2+pw], plane[q][ho*Wo+wo] =
    x[2ho+ph, 2wo+pw].  u_ref: (1,4,1,Wo,Cin) halo row (plane row above tile).
    """
    t = pl.program_id(1)
    Pot = o_ref.shape[2]
    cout = o_ref.shape[3]
    zf = jnp.where(t == 0, 0.0, 1.0).astype(jnp.bfloat16)

    p00 = c_ref[0, 0, 0]
    p01 = c_ref[0, 1, 0]
    p10 = c_ref[0, 2, 0]
    p11 = c_ref[0, 3, 0]

    def shift_down(plane, halo):
        # variant[ho] = plane[ho - 1]; row -1 comes from the halo (or zero).
        h = halo * zf
        if Pot == Wo:
            return h
        if Wo % 8 == 0:
            return jnp.concatenate([h, plane[:Pot - Wo]], axis=0)
        return jnp.concatenate(
            [h.astype(jnp.float32), plane[:Pot - Wo].astype(jnp.float32)],
            axis=0).astype(jnp.bfloat16)

    s10 = shift_down(p10, u_ref[0, 2, 0])
    s11 = shift_down(p11, u_ref[0, 3, 0])

    def group(lhss, taps):
        acc = jnp.zeros((Pot, cout), jnp.float32)
        for lhs, k in zip(lhss, taps):
            acc = acc + jnp.dot(lhs, w_ref[k],
                                preferred_element_type=jnp.float32)
        return acc

    # Taps: k = (dh+1)*3 + (dw+1); LHS per dh = [shifted ph=1, ph=0, ph=1].
    z_m1 = group([s11, p01, p11], [0, 3, 6])      # dw = -1 (pw=1, aw=-1)
    z_0 = group([s10, p00, p10], [1, 4, 7])       # dw =  0 (pw=0)
    z_p1 = group([s11, p01, p11], [2, 5, 8])      # dw = +1 (pw=1, aw=0)

    col = lax.broadcasted_iota(jnp.int32, (Pot, 1), 0) % Wo
    out = z_0 + z_p1 + _shift_rows(z_m1, -1, col >= 1, Pot)
    out = out + b_ref[...]
    if relu:
        out = jnp.maximum(out, 0.0)
    o_ref[0, 0] = out.astype(o_ref.dtype)


# ----------------------------- wrappers -------------------------------------

_COMPILER_PARAMS = pltpu.CompilerParams(
    dimension_semantics=("parallel", "parallel"),   # batch x row-tiles
    vmem_limit_bytes=48 * 1024 * 1024,              # under v7x's 64 MiB
)


def conv3x3(xs_ws, b, *, stride=1, relu=True, out_dtype=jnp.bfloat16,
            max_pt=512):
    """3x3 conv (padding=1) over the channel-concat of the given inputs.

    xs_ws: list of (x, w), x: (N,H,W,Cin_i) bf16, w: (9,Cin_i,Cout) bf16.
    b: (Cout,) float32.  stride in {1,2}; optional fused ReLU.  `max_pt` bounds
    the flattened spatial tile (rows-per-tile * W) per grid step.
    """
    x0, w0 = xs_ws[0]
    N, H, W, _ = x0.shape
    cout = w0.shape[-1]
    b2 = b.reshape(1, cout).astype(jnp.float32)

    if stride == 1:
        TH = _pick_tile_rows(H, W, max_pt)
        T = H // TH
        Pt = TH * W

        args, in_specs = [], []
        for x, _ in xs_ws:
            cin = x.shape[-1]
            args.append(x.reshape(N, T, Pt, cin))                 # center tiles
            in_specs.append(pl.BlockSpec((1, 1, Pt, cin),
                                          lambda n, t: (n, t, 0, 0)))
            args.append(x)                                        # up halo row
            in_specs.append(pl.BlockSpec(
                (1, 1, W, cin),
                lambda n, t: (n, jnp.maximum(t * TH - 1, 0), 0, 0)))
            args.append(x)                                        # down halo row
            in_specs.append(pl.BlockSpec(
                (1, 1, W, cin),
                lambda n, t: (n, jnp.minimum(t * TH + TH, H - 1), 0, 0)))
        for _, w in xs_ws:
            args.append(w)
            in_specs.append(pl.BlockSpec(w.shape, lambda n, t: (0, 0, 0)))
        args.append(b2)
        in_specs.append(pl.BlockSpec((1, cout), lambda n, t: (0, 0)))

        kernel = functools.partial(_conv_s1_kernel, W=W, n_in=len(xs_ws),
                                   relu=relu)
        out = pl.pallas_call(
            kernel,
            out_shape=jax.ShapeDtypeStruct((N, T, Pt, cout), out_dtype),
            grid_spec=pltpu.PrefetchScalarGridSpec(
                num_scalar_prefetch=0,
                grid=(N, T),
                in_specs=in_specs,
                out_specs=pl.BlockSpec((1, 1, Pt, cout),
                                       lambda n, t: (n, t, 0, 0)),
            ),
            compiler_params=_COMPILER_PARAMS,
        )(*args)
        return out.reshape(N, H, W, cout)

    assert stride == 2 and len(xs_ws) == 1
    assert H % 2 == 0 and W % 2 == 0
    x, w = xs_ws[0]
    cin = x.shape[-1]
    Ho, Wo = H // 2, W // 2
    THo = _pick_tile_rows(Ho, Wo, max_pt)
    To = Ho // THo
    Pot = THo * Wo

    # Even/odd parity planes (same total bytes as x).
    xp6 = x.reshape(N, Ho, 2, Wo, 2, cin).transpose(0, 2, 4, 1, 3, 5)
    xp_t = xp6.reshape(N, 4, To, Pot, cin)
    xp_h = xp6.reshape(N, 4, Ho, Wo, cin)

    kernel = functools.partial(_conv_s2_kernel, Wo=Wo, relu=relu)
    out = pl.pallas_call(
        kernel,
        out_shape=jax.ShapeDtypeStruct((N, To, Pot, cout), out_dtype),
        grid_spec=pltpu.PrefetchScalarGridSpec(
            num_scalar_prefetch=0,
            grid=(N, To),
            in_specs=[
                pl.BlockSpec((1, 4, 1, Pot, cin),
                             lambda n, t: (n, 0, t, 0, 0)),
                pl.BlockSpec((1, 4, 1, Wo, cin),
                             lambda n, t: (n, 0, jnp.maximum(t * THo - 1, 0),
                                           0, 0)),
                pl.BlockSpec((9, cin, cout), lambda n, t: (0, 0, 0)),
                pl.BlockSpec((1, cout), lambda n, t: (0, 0)),
            ],
            out_specs=pl.BlockSpec((1, 1, Pot, cout),
                                   lambda n, t: (n, t, 0, 0)),
        ),
        compiler_params=_COMPILER_PARAMS,
    )(xp_t, xp_h, w, b2)
    return out.reshape(N, Ho, Wo, cout)


def upsample2(x):
    # nn.Upsample(scale_factor=2), default mode='nearest' (NHWC).
    return jnp.repeat(jnp.repeat(x, 2, axis=1), 2, axis=2)


# --------------------------- parameters -------------------------------------

def _init_conv(key, cin, cout):
    kw_, kb_ = jax.random.split(key)
    bound = 1.0 / float(np.sqrt(cin * 3 * 3))   # PyTorch-style uniform bound
    w = jax.random.uniform(kw_, (3, 3, cin, cout), jnp.float32, -bound, bound)
    b = jax.random.uniform(kb_, (cout,), jnp.float32, -bound, bound)
    return w.reshape(9, cin, cout).astype(jnp.bfloat16), b


def init_params(key, ch_in, hidden_num=128):
    specs = {
        'block_1':    [(ch_in, hidden_num)],
        'block1':     [(hidden_num, 128), (128, 128)],
        'block2':     [(128, 256), (256, 256)],
        'block3':     [(256, 384), (384, 384)],
        'block4':     [(384, 512), (512, 512)],
        'block_one1': [(128, 128)],
        'block_one2': [(256, 256)],
        'block_one3': [(384, 384)],
        'block5':     [(1024, 128), (128, 128)],
        'block6':     [(512, 128), (128, 128)],
        'block7':     [(384, 128), (128, 128)],
        'block8':     [(256, 128), (128, 128)],
        'conv_last':  [(128, 3)],
    }
    params = {}
    for name, convs in specs.items():
        layer = []
        for cin, cout in convs:
            key, sub = jax.random.split(key)
            layer.append(_init_conv(sub, cin, cout))
        params[name] = layer
    return params


# ----------------------------- forward --------------------------------------

def forward_nhwc(params, x):
    x = x.astype(jnp.bfloat16)

    def blk(name, x):                       # block(): conv+relu, conv+relu
        for w, b in params[name]:
            x = conv3x3([(x, w)], b, relu=True)
        return x

    def blk_s2(name, x):                    # block_one(..., stride=2)
        (w, b), = params[name]
        return conv3x3([(x, w)], b, stride=2, relu=True)

    def blk_cat(name, x1, x2):              # concat fused into the first conv
        convs = params[name]
        w0, b0 = convs[0]
        c1 = x1.shape[-1]
        x = conv3x3([(x1, w0[:, :c1, :]), (x2, w0[:, c1:, :])], b0, relu=True)
        for w, b in convs[1:]:
            x = conv3x3([(x, w)], b, relu=True)
        return x

    enc = []
    x = blk('block_1', x)
    x = blk('block1', x); enc.append(x)      # 128 ch, full res
    x = blk_s2('block_one1', x)
    x = blk('block2', x); enc.append(x)      # 256 ch, 1/2 res
    x = blk_s2('block_one2', x)
    x = blk('block3', x); enc.append(x)      # 384 ch, 1/4 res
    x = blk_s2('block_one3', x)
    x = blk('block4', x); enc.append(x)      # 512 ch, 1/8 res

    x = blk_cat('block5', x, enc[-1])        # cat([x, x]) -> 1024 ch (fused)
    x = upsample2(x)
    x = blk_cat('block6', x, enc[-2])        # 128 + 384 = 512 ch (fused)
    x = upsample2(x)
    x = blk_cat('block7', x, enc[-3])        # 128 + 256 = 384 ch (fused)
    x = upsample2(x)
    x = blk_cat('block8', x, enc[-4])        # 128 + 128 = 256 ch (fused)

    # conv_last: pad Cout 3 -> 128 for lane-dense stores, bf16 output.
    (wl, bl), = params['conv_last']
    wl_p = jnp.zeros((9, wl.shape[1], 128), wl.dtype).at[:, :, :3].set(wl)
    bl_p = jnp.zeros((128,), bl.dtype).at[:3].set(bl)
    y = conv3x3([(x, wl_p)], bl_p, relu=False)
    return y[..., :3].astype(jnp.float32)


@jax.jit
def forward_nchw(params, x_nchw):
    x = jnp.transpose(x_nchw, (0, 2, 3, 1))      # NCHW -> NHWC
    y = forward_nhwc(params, x)
    return jnp.transpose(y, (0, 3, 1, 2))        # NHWC -> NCHW


# ------------------------- correctness checks --------------------------------

def _reference_conv(x, w, b, stride, relu):
    out = lax.conv_general_dilated(
        x, w, window_strides=(stride, stride), padding=((1, 1), (1, 1)),
        dimension_numbers=('NHWC', 'HWIO', 'NHWC'),
        precision=lax.Precision.HIGHEST)
    out = out + b
    if relu:
        out = jnp.maximum(out, 0.0)
    return out


def _check_conv(key, N, H, W, cin, cout, stride, max_pt=512):
    k1, k2, k3 = jax.random.split(key, 3)
    bound = 1.0 / float(np.sqrt(cin * 9))
    x = jax.random.normal(k1, (N, H, W, cin), jnp.float32)
    w = jax.random.uniform(k2, (3, 3, cin, cout), jnp.float32, -bound, bound)
    b = jax.random.uniform(k3, (cout,), jnp.float32, -bound, bound)
    xb = x.astype(jnp.bfloat16)
    wb = w.astype(jnp.bfloat16)
    got = conv3x3([(xb, wb.reshape(9, cin, cout))], b, stride=stride,
                  relu=True, max_pt=max_pt).astype(jnp.float32)
    want = _reference_conv(xb.astype(jnp.float32), wb.astype(jnp.float32),
                           b, stride, True)
    err = float(jnp.max(jnp.abs(got - want)))
    assert err < 0.06, (H, W, cin, cout, stride, max_pt, err)


def _check_conv_cat(key, N, H, W, c1, c2, cout, max_pt=512):
    k1, k2, k3, k4 = jax.random.split(key, 4)
    cin = c1 + c2
    bound = 1.0 / float(np.sqrt(cin * 9))
    x1 = jax.random.normal(k1, (N, H, W, c1), jnp.float32)
    x2 = jax.random.normal(k2, (N, H, W, c2), jnp.float32)
    w = jax.random.uniform(k3, (3, 3, cin, cout), jnp.float32, -bound, bound)
    b = jax.random.uniform(k4, (cout,), jnp.float32, -bound, bound)
    x1b, x2b = x1.astype(jnp.bfloat16), x2.astype(jnp.bfloat16)
    wb = w.astype(jnp.bfloat16).reshape(9, cin, cout)
    got = conv3x3([(x1b, wb[:, :c1, :]), (x2b, wb[:, c1:, :])], b,
                  relu=True, max_pt=max_pt).astype(jnp.float32)
    xcat = jnp.concatenate([x1b, x2b], axis=-1).astype(jnp.float32)
    want = _reference_conv(xcat, w.astype(jnp.bfloat16).astype(jnp.float32),
                           b, 1, True)
    err = float(jnp.max(jnp.abs(got - want)))
    assert err < 0.06, (H, W, c1, c2, cout, max_pt, err)


if __name__ == "__main__":
    key = jax.random.PRNGKey(0)
    pkey, xkey, ckey = jax.random.split(key, 3)

    # Spot-check the conv kernels against lax reference convs.
    ck = jax.random.split(ckey, 8)
    _check_conv(ck[0], 2, 8, 8, 32, 64, stride=1)              # single tile
    _check_conv(ck[1], 1, 32, 16, 32, 64, stride=1, max_pt=128)  # 4 row-tiles
    _check_conv(ck[2], 1, 2, 2, 32, 48, stride=1)              # tiny fallback
    _check_conv(ck[3], 2, 8, 8, 32, 64, stride=2)              # Wo=4 fallback
    _check_conv(ck[4], 1, 32, 16, 32, 48, stride=2, max_pt=64)   # 2 row-tiles
    _check_conv(ck[5], 1, 4, 4, 32, 48, stride=2)              # Pot=4 fallback
    _check_conv_cat(ck[6], 1, 8, 8, 16, 24, 32)                # fused concat
    _check_conv_cat(ck[7], 1, 32, 16, 16, 24, 32, max_pt=128)  # fused + tiled

    ch_in = 4            # repeat_num is unused in the PyTorch forward pass
    params = init_params(pkey, ch_in, hidden_num=128)

    # Spatial size must be divisible by 8 (three stride-2 downsamples).
    x = jax.random.normal(xkey, (2, ch_in, 16, 16), jnp.float32)  # NCHW input

    out = forward_nchw(params, x)
    out = jax.block_until_ready(out)
    assert out.shape == (2, 3, 16, 16), out.shape
    assert jnp.isfinite(out).all()
    print("KERNEL_OK")
</pallas_src>

<mosaic_0001>
module attributes {stable_mosaic.version = 11 : i64} {
  func.func @_conv_s1_kernel(%arg0: i32, %arg1: i32, %arg2: memref<1x1x64x32xbf16, #tpu.memory_space<vmem>>, %arg3: memref<1x1x8x32xbf16, #tpu.memory_space<vmem>>, %arg4: memref<1x1x8x32xbf16, #tpu.memory_space<vmem>>, %arg5: memref<9x32x64xbf16, #tpu.memory_space<vmem>>, %arg6: memref<1x64xf32, #tpu.memory_space<vmem>>, %arg7: memref<1x1x64x64xbf16, #tpu.memory_space<vmem>>) attributes {dimension_semantics = [#tpu.dimension_semantics<parallel>, #tpu.dimension_semantics<parallel>], iteration_bounds = array<i64: 2, 1>, scalar_prefetch = 0 : i64, scratch_operands = 0 : i64, tpu.core_type = #tpu.core_type<tc>, window_params = [{transform_indices = @transform_0, window_bounds = array<i64: 1, 1, 64, 32>}, {transform_indices = @transform_1, window_bounds = array<i64: 1, 1, 8, 32>}, {transform_indices = @transform_2, window_bounds = array<i64: 1, 1, 8, 32>}, {pipeline_mode = #tpu.pipeline_mode<synchronous>, transform_indices = @transform_3, window_bounds = array<i64: 9, 32, 64>}, {pipeline_mode = #tpu.pipeline_mode<synchronous>, transform_indices = @transform_4, window_bounds = array<i64: 1, 64>}, {transform_indices = @transform_5, window_bounds = array<i64: 1, 1, 64, 64>}]} {
    %c0_i32 = arith.constant 0 : i32
    %0 = arith.cmpi eq, %arg1, %c0_i32 : i32
    %cst = arith.constant 0.000000e+00 : f32
    %cst_0 = arith.constant 1.000000e+00 : f32
    %1 = arith.select %0, %cst, %cst_0 : f32
    %2 = arith.truncf %1 : f32 to bf16
    %c0_i32_1 = arith.constant 0 : i32
    %3 = arith.cmpi eq, %arg1, %c0_i32_1 : i32
    %cst_2 = arith.constant 0.000000e+00 : f32
    %cst_3 = arith.constant 1.000000e+00 : f32
    %4 = arith.select %3, %cst_2, %cst_3 : f32
    %5 = arith.truncf %4 : f32 to bf16
    %cst_4 = arith.constant 0.000000e+00 : f32
    %6 = vector.broadcast %cst_4 : f32 to vector<64x64xf32>
    %cst_5 = arith.constant 0.000000e+00 : f32
    %7 = vector.broadcast %cst_5 : f32 to vector<64x64xf32>
    %cst_6 = arith.constant 0.000000e+00 : f32
    %8 = vector.broadcast %cst_6 : f32 to vector<64x64xf32>
    %c0 = arith.constant 0 : index
    %c0_7 = arith.constant 0 : index
    %c0_8 = arith.constant 0 : index
    %c0_9 = arith.constant 0 : index
    %9 = vector.load %arg2[%c0, %c0_7, %c0_8, %c0_9] : memref<1x1x64x32xbf16, #tpu.memory_space<vmem>>, vector<1x1x64x32xbf16>
    %10 = vector.shape_cast %9 : vector<1x1x64x32xbf16> to vector<64x32xbf16>
    %c0_10 = arith.constant 0 : index
    %c0_11 = arith.constant 0 : index
    %c0_12 = arith.constant 0 : index
    %c0_13 = arith.constant 0 : index
    %11 = vector.load %arg3[%c0_10, %c0_11, %c0_12, %c0_13] : memref<1x1x8x32xbf16, #tpu.memory_space<vmem>>, vector<1x1x8x32xbf16>
    %12 = vector.shape_cast %11 : vector<1x1x8x32xbf16> to vector<8x32xbf16>
    %13 = vector.broadcast %2 : bf16 to vector<8x32xbf16>
    %14 = arith.mulf %12, %13 : vector<8x32xbf16>
    %c0_14 = arith.constant 0 : index
    %c0_15 = arith.constant 0 : index
    %c0_16 = arith.constant 0 : index
    %c0_17 = arith.constant 0 : index
    %15 = vector.load %arg4[%c0_14, %c0_15, %c0_16, %c0_17] : memref<1x1x8x32xbf16, #tpu.memory_space<vmem>>, vector<1x1x8x32xbf16>
    %16 = vector.shape_cast %15 : vector<1x1x8x32xbf16> to vector<8x32xbf16>
    %17 = vector.broadcast %5 : bf16 to vector<8x32xbf16>
    %18 = arith.mulf %16, %17 : vector<8x32xbf16>
    %19 = tpu.concatenate %14, %10, %18 in 0 : vector<8x32xbf16>, vector<64x32xbf16>, vector<8x32xbf16> -> vector<80x32xbf16>
    %20 = vector.extract_strided_slice %19 {offsets = [0, 0], sizes = [64, 32], strides = [1, 1]} : vector<80x32xbf16> to vector<64x32xbf16>
    %21 = vector.extract_strided_slice %19 {offsets = [8, 0], sizes = [64, 32], strides = [1, 1]} : vector<80x32xbf16> to vector<64x32xbf16>
    %22 = vector.extract_strided_slice %19 {offsets = [16, 0], sizes = [64, 32], strides = [1, 1]} : vector<80x32xbf16> to vector<64x32xbf16>
    %c0_18 = arith.constant 0 : index
    %c0_19 = arith.constant 0 : index
    %c0_20 = arith.constant 0 : index
    %23 = vector.load %arg5[%c0_18, %c0_19, %c0_20] : memref<9x32x64xbf16, #tpu.memory_space<vmem>>, vector<1x32x64xbf16>
    %24 = vector.shape_cast %23 : vector<1x32x64xbf16> to vector<32x64xbf16>
    %cst_21 = arith.constant dense<0.000000e+00> : vector<64x64xf32>
    %25 = tpu.matmul %20, %24, %cst_21 {dimension_numbers = #tpu.dot_dimension_numbers<[1], [0], [0], [1], [0, 0, 1, 1], [], []>} : vector<64x32xbf16>, vector<32x64xbf16>, vector<64x64xf32> -> vector<64x64xf32>
    %26 = arith.addf %6, %25 : vector<64x64xf32>
    %c3 = arith.constant 3 : index
    %c0_22 = arith.constant 0 : index
    %c0_23 = arith.constant 0 : index
    %27 = vector.load %arg5[%c3, %c0_22, %c0_23] : memref<9x32x64xbf16, #tpu.memory_space<vmem>>, vector<1x32x64xbf16>
    %28 = vector.shape_cast %27 : vector<1x32x64xbf16> to vector<32x64xbf16>
    %cst_24 = arith.constant dense<0.000000e+00> : vector<64x64xf32>
    %29 = tpu.matmul %21, %28, %cst_24 {dimension_numbers = #tpu.dot_dimension_numbers<[1], [0], [0], [1], [0, 0, 1, 1], [], []>} : vector<64x32xbf16>, vector<32x64xbf16>, vector<64x64xf32> -> vector<64x64xf32>
    %30 = arith.addf %26, %29 : vector<64x64xf32>
    %c6 = arith.constant 6 : index
    %c0_25 = arith.constant 0 : index
    %c0_26 = arith.constant 0 : index
    %31 = vector.load %arg5[%c6, %c0_25, %c0_26] : memref<9x32x64xbf16, #tpu.memory_space<vmem>>, vector<1x32x64xbf16>
    %32 = vector.shape_cast %31 : vector<1x32x64xbf16> to vector<32x64xbf16>
    %cst_27 = arith.constant dense<0.000000e+00> : vector<64x64xf32>
    %33 = tpu.matmul %22, %32, %cst_27 {dimension_numbers = #tpu.dot_dimension_numbers<[1], [0], [0], [1], [0, 0, 1, 1], [], []>} : vector<64x32xbf16>, vector<32x64xbf16>, vector<64x64xf32> -> vector<64x64xf32>
    %34 = arith.addf %30, %33 : vector<64x64xf32>
    %c1 = arith.constant 1 : index
    %c0_28 = arith.constant 0 : index
    %c0_29 = arith.constant 0 : index
    %35 = vector.load %arg5[%c1, %c0_28, %c0_29] : memref<9x32x64xbf16, #tpu.memory_space<vmem>>, vector<1x32x64xbf16>
    %36 = vector.shape_cast %35 : vector<1x32x64xbf16> to vector<32x64xbf16>
    %cst_30 = arith.constant dense<0.000000e+00> : vector<64x64xf32>
    %37 = tpu.matmul %20, %36, %cst_30 {dimension_numbers = #tpu.dot_dimension_numbers<[1], [0], [0], [1], [0, 0, 1, 1], [], []>} : vector<64x32xbf16>, vector<32x64xbf16>, vector<64x64xf32> -> vector<64x64xf32>
    %38 = arith.addf %7, %37 : vector<64x64xf32>
    %c4 = arith.constant 4 : index
    %c0_31 = arith.constant 0 : index
    %c0_32 = arith.constant 0 : index
    %39 = vector.load %arg5[%c4, %c0_31, %c0_32] : memref<9x32x64xbf16, #tpu.memory_space<vmem>>, vector<1x32x64xbf16>
    %40 = vector.shape_cast %39 : vector<1x32x64xbf16> to vector<32x64xbf16>
    %cst_33 = arith.constant dense<0.000000e+00> : vector<64x64xf32>
    %41 = tpu.matmul %21, %40, %cst_33 {dimension_numbers = #tpu.dot_dimension_numbers<[1], [0], [0], [1], [0, 0, 1, 1], [], []>} : vector<64x32xbf16>, vector<32x64xbf16>, vector<64x64xf32> -> vector<64x64xf32>
    %42 = arith.addf %38, %41 : vector<64x64xf32>
    %c7 = arith.constant 7 : index
    %c0_34 = arith.constant 0 : index
    %c0_35 = arith.constant 0 : index
    %43 = vector.load %arg5[%c7, %c0_34, %c0_35] : memref<9x32x64xbf16, #tpu.memory_space<vmem>>, vector<1x32x64xbf16>
    %44 = vector.shape_cast %43 : vector<1x32x64xbf16> to vector<32x64xbf16>
    %cst_36 = arith.constant dense<0.000000e+00> : vector<64x64xf32>
    %45 = tpu.matmul %22, %44, %cst_36 {dimension_numbers = #tpu.dot_dimension_numbers<[1], [0], [0], [1], [0, 0, 1, 1], [], []>} : vector<64x32xbf16>, vector<32x64xbf16>, vector<64x64xf32> -> vector<64x64xf32>
    %46 = arith.addf %42, %45 : vector<64x64xf32>
    %c2 = arith.constant 2 : index
    %c0_37 = arith.constant 0 : index
    %c0_38 = arith.constant 0 : index
    %47 = vector.load %arg5[%c2, %c0_37, %c0_38] : memref<9x32x64xbf16, #tpu.memory_space<vmem>>, vector<1x32x64xbf16>
    %48 = vector.shape_cast %47 : vector<1x32x64xbf16> to vector<32x64xbf16>
    %cst_39 = arith.constant dense<0.000000e+00> : vector<64x64xf32>
    %49 = tpu.matmul %20, %48, %cst_39 {dimension_numbers = #tpu.dot_dimension_numbers<[1], [0], [0], [1], [0, 0, 1, 1], [], []>} : vector<64x32xbf16>, vector<32x64xbf16>, vector<64x64xf32> -> vector<64x64xf32>
    %50 = arith.addf %8, %49 : vector<64x64xf32>
    %c5 = arith.constant 5 : index
    %c0_40 = arith.constant 0 : index
    %c0_41 = arith.constant 0 : index
    %51 = vector.load %arg5[%c5, %c0_40, %c0_41] : memref<9x32x64xbf16, #tpu.memory_space<vmem>>, vector<1x32x64xbf16>
    %52 = vector.shape_cast %51 : vector<1x32x64xbf16> to vector<32x64xbf16>
    %cst_42 = arith.constant dense<0.000000e+00> : vector<64x64xf32>
    %53 = tpu.matmul %21, %52, %cst_42 {dimension_numbers = #tpu.dot_dimension_numbers<[1], [0], [0], [1], [0, 0, 1, 1], [], []>} : vector<64x32xbf16>, vector<32x64xbf16>, vector<64x64xf32> -> vector<64x64xf32>
    %54 = arith.addf %50, %53 : vector<64x64xf32>
    %c8 = arith.constant 8 : index
    %c0_43 = arith.constant 0 : index
    %c0_44 = arith.constant 0 : index
    %55 = vector.load %arg5[%c8, %c0_43, %c0_44] : memref<9x32x64xbf16, #tpu.memory_space<vmem>>, vector<1x32x64xbf16>
    %56 = vector.shape_cast %55 : vector<1x32x64xbf16> to vector<32x64xbf16>
    %cst_45 = arith.constant dense<0.000000e+00> : vector<64x64xf32>
    %57 = tpu.matmul %22, %56, %cst_45 {dimension_numbers = #tpu.dot_dimension_numbers<[1], [0], [0], [1], [0, 0, 1, 1], [], []>} : vector<64x32xbf16>, vector<32x64xbf16>, vector<64x64xf32> -> vector<64x64xf32>
    %58 = arith.addf %54, %57 : vector<64x64xf32>
    %59 = tpu.iota {dimensions = array<i32: 0>} : vector<64x1xi32>
    %c8_i32 = arith.constant 8 : i32
    %c0_i32_46 = arith.constant 0 : i32
    %60 = arith.cmpi eq, %c8_i32, %c0_i32_46 : i32
    %c1_i32 = arith.constant 1 : i32
    %61 = arith.select %60, %c1_i32, %c8_i32 : i32
    %62 = vector.broadcast %61 : i32 to vector<64x1xi32>
    %63 = arith.remsi %59, %62 : vector<64x1xi32>
    %c0_i32_47 = arith.constant 0 : i32
    %64 = vector.broadcast %c0_i32_47 : i32 to vector<64x1xi32>
    %65 = arith.cmpi ne, %63, %64 : vector<64x1xi32>
    %c0_i32_48 = arith.constant 0 : i32
    %66 = vector.broadcast %c0_i32_48 : i32 to vector<64x1xi32>
    %67 = arith.cmpi slt, %63, %66 : vector<64x1xi32>
    %c0_i32_49 = arith.constant 0 : i32
    %68 = arith.cmpi slt, %61, %c0_i32_49 : i32
    %69 = vector.broadcast %68 : i1 to vector<64x1xi1>
    %70 = vector.broadcast %69 : vector<64x1xi1> to vector<64x1xi1>
    %71 = arith.xori %67, %70 : vector<64x1xi1>
    %72 = arith.andi %71, %65 : vector<64x1xi1>
    %73 = vector.broadcast %61 : i32 to vector<64x1xi32>
    %74 = arith.addi %63, %73 : vector<64x1xi32>
    %75 = arith.select %72, %74, %63 : vector<64x1xi1>, vector<64x1xi32>
    %c1_i32_50 = arith.constant 1 : i32
    %76 = vector.broadcast %c1_i32_50 : i32 to vector<64x1xi32>
    %77 = arith.cmpi sge, %75, %76 : vector<64x1xi32>
    %c1_i32_51 = arith.constant 1 : i32
    %78 = tpu.dynamic_rotate %34 by %c1_i32_51 dim 0 : vector<64x64xf32>, i32 -> vector<64x64xf32>
    %cst_52 = arith.constant 0.000000e+00 : f32
    %79 = vector.shape_cast %77 : vector<64x1xi1> to vector<64x1xi1>
    %80 = vector.broadcast %79 : vector<64x1xi1> to vector<64x64xi1>
    %81 = vector.broadcast %cst_52 : f32 to vector<64x64xf32>
    %82 = arith.select %80, %78, %81 : vector<64x64xi1>, vector<64x64xf32>
    %83 = arith.addf %46, %82 : vector<64x64xf32>
    %c6_i32 = arith.constant 6 : i32
    %84 = vector.broadcast %c6_i32 : i32 to vector<64x1xi32>
    %85 = arith.cmpi sle, %75, %84 : vector<64x1xi32>
    %c63_i32 = arith.constant 63 : i32
    %86 = tpu.dynamic_rotate %58 by %c63_i32 dim 0 : vector<64x64xf32>, i32 -> vector<64x64xf32>
    %cst_53 = arith.constant 0.000000e+00 : f32
    %87 = vector.shape_cast %85 : vector<64x1xi1> to vector<64x1xi1>
    %88 = vector.broadcast %87 : vector<64x1xi1> to vector<64x64xi1>
    %89 = vector.broadcast %cst_53 : f32 to vector<64x64xf32>
    %90 = arith.select %88, %86, %89 : vector<64x64xi1>, vector<64x64xf32>
    %91 = arith.addf %83, %90 : vector<64x64xf32>
    %c0_54 = arith.constant 0 : index
    %c0_55 = arith.constant 0 : index
    %92 = vector.load %arg6[%c0_54, %c0_55] : memref<1x64xf32, #tpu.memory_space<vmem>>, vector<1x64xf32>
    %93 = vector.broadcast %92 : vector<1x64xf32> to vector<64x64xf32>
    %94 = arith.addf %91, %93 : vector<64x64xf32>
    %cst_56 = arith.constant 0.000000e+00 : f32
    %95 = vector.broadcast %cst_56 : f32 to vector<64x64xf32>
    %96 = arith.maximumf %94, %95 : vector<64x64xf32>
    %97 = arith.truncf %96 : vector<64x64xf32> to vector<64x64xbf16>
    %c0_57 = arith.constant 0 : index
    %c0_58 = arith.constant 0 : index
    %c0_59 = arith.constant 0 : index
    %c0_60 = arith.constant 0 : index
    %98 = vector.load %arg7[%c0_57, %c0_58, %c0_59, %c0_60] : memref<1x1x64x64xbf16, #tpu.memory_space<vmem>>, vector<1x1x64x64xbf16>
    %99 = vector.shape_cast %98 : vector<1x1x64x64xbf16> to vector<64x64xbf16>
    %100 = vector.shape_cast %97 : vector<64x64xbf16> to vector<1x1x64x64xbf16>
    tpu.vector_store %arg7[%c0_57, %c0_58, %c0_59, %c0_60], %100 {strides = array<i32>} : memref<1x1x64x64xbf16, #tpu.memory_space<vmem>>, vector<1x1x64x64xbf16>,
    return
  }
  func.func @transform_0(%arg0: i32, %arg1: i32) -> (i32, i32, i32, i32) {
    %c0_i32 = arith.constant 0 : i32
    %c0_i32_0 = arith.constant 0 : i32
    %c0_i32_1 = arith.constant 0 : i32
    return %arg0, %arg1, %c0_i32, %c0_i32_0 : i32, i32, i32, i32
  }
  func.func @transform_1(%arg0: i32, %arg1: i32) -> (i32, i32, i32, i32) {
    %c8_i32 = arith.constant 8 : i32
    %0 = arith.muli %arg1, %c8_i32 : i32
    %c1_i32 = arith.constant 1 : i32
    %1 = arith.subi %0, %c1_i32 : i32
    %c0_i32 = arith.constant 0 : i32
    %2 = arith.maxsi %1, %c0_i32 : i32
    %c0_i32_0 = arith.constant 0 : i32
    %c0_i32_1 = arith.constant 0 : i32
    %c0_i32_2 = arith.constant 0 : i32
    return %arg0, %2, %c0_i32_0, %c0_i32_1 : i32, i32, i32, i32
  }
  func.func @transform_2(%arg0: i32, %arg1: i32) -> (i32, i32, i32, i32) {
    %c8_i32 = arith.constant 8 : i32
    %0 = arith.muli %arg1, %c8_i32 : i32
    %c8_i32_0 = arith.constant 8 : i32
    %1 = arith.addi %0, %c8_i32_0 : i32
    %c7_i32 = arith.constant 7 : i32
    %2 = arith.minsi %1, %c7_i32 : i32
    %c0_i32 = arith.constant 0 : i32
    %c0_i32_1 = arith.constant 0 : i32
    %c0_i32_2 = arith.constant 0 : i32
    return %arg0, %2, %c0_i32, %c0_i32_1 : i32, i32, i32, i32
  }
  func.func @transform_3(%arg0: i32, %arg1: i32) -> (i32, i32, i32) {
    %c0_i32 = arith.constant 0 : i32
    %c0_i32_0 = arith.constant 0 : i32
    %c0_i32_1 = arith.constant 0 : i32
    %c0_i32_2 = arith.constant 0 : i32
    return %c0_i32, %c0_i32_0, %c0_i32_1 : i32, i32, i32
  }
  func.func @transform_4(%arg0: i32, %arg1: i32) -> (i32, i32) {
    %c0_i32 = arith.constant 0 : i32
    %c0_i32_0 = arith.constant 0 : i32
    %c0_i32_1 = arith.constant 0 : i32
    return %c0_i32, %c0_i32_0 : i32, i32
  }
  func.func @transform_5(%arg0: i32, %arg1: i32) -> (i32, i32, i32, i32) {
    %c0_i32 = arith.constant 0 : i32
    %c0_i32_0 = arith.constant 0 : i32
    %c0_i32_1 = arith.constant 0 : i32
    return %arg0, %arg1, %c0_i32, %c0_i32_0 : i32, i32, i32, i32
  }
}

</mosaic_0001>

<llo_original>
// kernel: tpu_custom_call.1
$region0: #{tpu_custom_call.1}
  #allocation0 [shape = 'u32[]', space=smem, size = 0x4, offset = 0x4, fixed_abs, tag = 'smem constant byte address 0x4 - core index']
  #allocation1 [shape = 'u32[144,128]{1,0:T(1,128)}', space=vmem, size = 0x12000, scoped, tag = 'internal scratch']
  %s0 = inlined_call_operand.vmem [shape: bf16[2,1,64,32], index: 0, kind: input, shape index: {}]
  %s1 = inlined_call_operand.vmem [shape: bf16[2,8,8,32], index: 1, kind: input, shape index: {}]
  %s2 = inlined_call_operand.hbm [shape: bf16[2,8,8,32], index: 2, kind: input, shape index: {}]
  %s3 = inlined_call_operand.hbm [shape: bf16[9,32,64], index: 3, kind: input, shape index: {}]
  %s4 = inlined_call_operand.vmem [shape: f32[1,64], index: 4, kind: input, shape index: {}]
  %s5 = inlined_call_operand.hbm [shape: bf16[2,1,64,64], index: 5, kind: output, shape index: {}]
  %s6 = sld [smem:[#allocation0]]
  $region61: #{tpu_custom_call.1} parent=0
    _
  %s8 = ssub.s32 1, %s6
  %s9 = scalar_select 0, %s8, %s6
  $region1: #{tpu_custom_call.1} parent=0
    #allocation2 [shape = 'u8[4096]{0}', space=vmem, size = 0x1000, scoped, tag = 'input window, operand 2']
    #allocation3 [shape = 's32[2]{0}', space=sflag, size = 0x8, scoped, tag = 'scoped memory for tpu_custom_call.1']
    #allocation4 [shape = 's32[2]{0}', space=sflag, size = 0x8, scoped, tag = 'scoped memory for tpu_custom_call.1']
    #allocation5 [shape = 'u8[73728]{0}', space=vmem, size = 0x12000, scoped, tag = 'input window, operand 3, single buffered']
    #allocation6 [shape = 's32[1]{0}', space=sflag, size = 0x4, scoped, tag = 'scoped memory for tpu_custom_call.1']
    #allocation7 [shape = 'u8[32768]{0}', space=vmem, size = 0x8000, scoped, tag = 'output window, operand 0']
    %10 = vsyncpa [#allocation3], 0
    %s11 = scalar_lea.sflag [#allocation3], 1
    %12 = vsyncpa %s11, 0
    %13 = vsyncpa [#allocation6], 0
    %14 = vsyncpa [#allocation4], 0
    %s15 = scalar_lea.sflag [#allocation4], 1
    %16 = vsyncpa %s15, 0
    loop: start=0, step=1, limit=4
    $region2: #{tpu_custom_call.1} parent=1 // loop_pre_header
      _
    $region3: #{tpu_custom_call.1} parent=1 // loop_header
      %s18 = sphi 0, %s22
      %p19 = scmp.ge.s32.totalorder %s18, 4
      %s25 = sphi 0, %s37
      %s26 = sphi 0, %s33
      %s27 = sphi 0, %s25
      %s28 = sphi 0, %s26
      %s29 = sphi 0, %s27
      %s30 = sphi 0, %s28
      %s42 = sphi 0, %s44
      %s45 = sphi 0, %s42
      %s46 = sphi 0, %s45
      %s62 = sphi 0, %s46
      %s78 = sphi 0, %s80
      %s81 = sphi 0, %s78
      %s82 = sphi 0, %s81
      %s98 = sphi 0, %s82
      %s114 = sphi 0, %s116
      %s117 = sphi 0, %s114
      %s118 = sphi 0, %s117
      %s134 = sphi 0, %s118
      %s138 = sphi 0, %s138
      %s140 = sphi 0, %s138
      %s141 = sphi 0, %s140
      %s155 = sphi 0, %s141
      %s159 = sphi 0, %s159
      %s161 = sphi 0, %s159
      %s162 = sphi 0, %s161
      %s176 = sphi 0, %s162
      %s184 = sphi 0, %s186
      %s187 = sphi 0, %s184
      %s188 = sphi 0, %s187
      %s204 = sphi 0, %s188
    $region4: #{tpu_custom_call.1} parent=1 // loop_header_branch
      %21 = sbr.rel (%p19) target = $region8
    $region5: #{tpu_custom_call.1} parent=1 // loop_body
      %s23 = ssub.s32 %s18, 1
      %s24 = ssub.s32 %s18, 2
      %s31 = sadd.s32 1, %s26
      %p32 = scmp.ge.s32.totalorder %s31, 1
      %s33 = scalar_select %p32, 0, %s31
      %s34 = sadd.s32 1, %s25
      %s35 = scalar_select %p32, %s34, %s25
      %p36 = scmp.ge.s32.totalorder %s35, 2
      %s37 = scalar_select %p36, 0, %s35
      %s38 = ssub.s32 %s25, %s37
      %s39 = ssub.s32 %s26, %s33
      %s40 = sor.u32 %s38, %s39
      %p41 = scmp.eq.s32.totalorder %s40, 0
      %s43 = sadd.s32 %s42, 1
      %s44 = scalar_select %p41, %s42, %s43
      %p47 = pneg %p41
      %p48 = scmp.eq.s32.totalorder %s18, 1
      %p49 = por %p47, %p48
      %p50 = scmp.ne.s32.totalorder %s42, %s45
      %p51 = scmp.eq.s32.totalorder %s18, 0
      %p52 = por %p50, %p51
      %p53 = scmp.ne.s32.totalorder %s42, %s45
      %p54 = scmp.eq.s32.totalorder %s23, 1
      %p55 = por %p53, %p54
      %p56 = scmp.ne.s32.totalorder %s45, %s46
      %p57 = scmp.eq.s32.totalorder %s23, 0
      %p58 = por %p56, %p57
      %p59 = scmp.ne.s32.totalorder %s45, %s46
      %p60 = scmp.eq.s32.totalorder %s24, 1
      %p61 = por %p59, %p60
      %p63 = scmp.ne.s32.totalorder %s46, %s62
      %p64 = scmp.eq.s32.totalorder %s24, 0
      %p65 = por %p63, %p64
      %s66 = smul.u32 %s26, 8
      %s67 = ssub.s32 %s66, 1
      %p68 = scmp.gt.s32.totalorder %s67, 0
      %s69 = scalar_select %p68, %s67, 0
      %s70 = smul.u32 %s33, 8
      %s71 = ssub.s32 %s70, 1
      %p72 = scmp.gt.s32.totalorder %s71, 0
      %s73 = scalar_select %p72, %s71, 0
      %s74 = ssub.s32 %s25, %s37
      %s75 = ssub.s32 %s69, %s73
      %s76 = sor.u32 %s74, %s75
      %p77 = scmp.eq.s32.totalorder %s76, 0
      %s79 = sadd.s32 %s78, 1
      %s80 = scalar_select %p77, %s78, %s79
      %p83 = pneg %p77
      %p84 = scmp.eq.s32.totalorder %s18, 1
      %p85 = por %p83, %p84
      %p86 = scmp.ne.s32.totalorder %s78, %s81
      %p87 = scmp.eq.s32.totalorder %s18, 0
      %p88 = por %p86, %p87
      %p89 = scmp.ne.s32.totalorder %s78, %s81
      %p90 = scmp.eq.s32.totalorder %s23, 1
      %p91 = por %p89, %p90
      %p92 = scmp.ne.s32.totalorder %s81, %s82
      %p93 = scmp.eq.s32.totalorder %s23, 0
      %p94 = por %p92, %p93
      %p95 = scmp.ne.s32.totalorder %s81, %s82
      %p96 = scmp.eq.s32.totalorder %s24, 1
      %p97 = por %p95, %p96
      %p99 = scmp.ne.s32.totalorder %s82, %s98
      %p100 = scmp.eq.s32.totalorder %s24, 0
      %p101 = por %p99, %p100
      %s102 = smul.u32 %s26, 8
      %s103 = sadd.s32 %s102, 8
      %p104 = scmp.lt.s32.totalorder %s103, 7
      %s105 = scalar_select %p104, %s103, 7
      %s106 = smul.u32 %s33, 8
      %s107 = sadd.s32 %s106, 8
      %p108 = scmp.lt.s32.totalorder %s107, 7
      %s109 = scalar_select %p108, %s107, 7
      %s110 = ssub.s32 %s25, %s37
      %s111 = ssub.s32 %s105, %s109
      %s112 = sor.u32 %s110, %s111
      %p113 = scmp.eq.s32.totalorder %s112, 0
      %s115 = sadd.s32 %s114, 1
      %s116 = scalar_select %p113, %s114, %s115
      %p119 = pneg %p113
      %p120 = scmp.eq.s32.totalorder %s18, 1
      %p121 = por %p119, %p120
      %p122 = scmp.ne.s32.totalorder %s114, %s117
      %p123 = scmp.eq.s32.totalorder %s18, 0
      %p124 = por %p122, %p123
      %p125 = scmp.ne.s32.totalorder %s114, %s117
      %p126 = scmp.eq.s32.totalorder %s23, 1
      %p127 = por %p125, %p126
      %p128 = scmp.ne.s32.totalorder %s117, %s118
      %p129 = scmp.eq.s32.totalorder %s23, 0
      %p130 = por %p128, %p129
      %p131 = scmp.ne.s32.totalorder %s117, %s118
      %p132 = scmp.eq.s32.totalorder %s24, 1
      %p133 = por %p131, %p132
      %p135 = scmp.ne.s32.totalorder %s118, %s134
      %p136 = scmp.eq.s32.totalorder %s24, 0
      %p137 = por %p135, %p136
      %s139 = sadd.s32 %s138, 1
      %p142 = scmp.eq.s32.totalorder %s18, 1
      %p143 = scmp.ne.s32.totalorder %s138, %s140
      %p144 = scmp.eq.s32.totalorder %s18, 0
      %p145 = por %p143, %p144
      %p146 = scmp.ne.s32.totalorder %s138, %s140
      %p147 = scmp.eq.s32.totalorder %s23, 1
      %p148 = por %p146, %p147
      %p149 = scmp.ne.s32.totalorder %s140, %s141
      %p150 = scmp.eq.s32.totalorder %s23, 0
      %p151 = por %p149, %p150
      %p152 = scmp.ne.s32.totalorder %s140, %s141
      %p153 = scmp.eq.s32.totalorder %s24, 1
      %p154 = por %p152, %p153
      %p156 = scmp.ne.s32.totalorder %s141, %s155
      %p157 = scmp.eq.s32.totalorder %s24, 0
      %p158 = por %p156, %p157
      %s160 = sadd.s32 %s159, 1
      %p163 = scmp.eq.s32.totalorder %s18, 1
      %p164 = scmp.ne.s32.totalorder %s159, %s161
      %p165 = scmp.eq.s32.totalorder %s18, 0
      %p166 = por %p164, %p165
      %p167 = scmp.ne.s32.totalorder %s159, %s161
      %p168 = scmp.eq.s32.totalorder %s23, 1
      %p169 = por %p167, %p168
      %p170 = scmp.ne.s32.totalorder %s161, %s162
      %p171 = scmp.eq.s32.totalorder %s23, 0
      %p172 = por %p170, %p171
      %p173 = scmp.ne.s32.totalorder %s161, %s162
      %p174 = scmp.eq.s32.totalorder %s24, 1
      %p175 = por %p173, %p174
      %p177 = scmp.ne.s32.totalorder %s162, %s176
      %p178 = scmp.eq.s32.totalorder %s24, 0
      %p179 = por %p177, %p178
      %s180 = ssub.s32 %s25, %s37
      %s181 = ssub.s32 %s26, %s33
      %s182 = sor.u32 %s180, %s181
      %p183 = scmp.eq.s32.totalorder %s182, 0
      %s185 = sadd.s32 %s184, 1
      %s186 = scalar_select %p183, %s184, %s185
      %p189 = pneg %p183
      %p190 = scmp.eq.s32.totalorder %s18, 1
      %p191 = por %p189, %p190
      %p192 = scmp.ne.s32.totalorder %s184, %s187
      %p193 = scmp.eq.s32.totalorder %s18, 0
      %p194 = por %p192, %p193
      %p195 = scmp.ne.s32.totalorder %s184, %s187
      %p196 = scmp.eq.s32.totalorder %s23, 1
      %p197 = por %p195, %p196
      %p198 = scmp.ne.s32.totalorder %s187, %s188
      %p199 = scmp.eq.s32.totalorder %s23, 0
      %p200 = por %p198, %p199
      %p201 = scmp.ne.s32.totalorder %s187, %s188
      %p202 = scmp.eq.s32.totalorder %s24, 1
      %p203 = por %p201, %p202
      %p205 = scmp.ne.s32.totalorder %s188, %s204
      %p206 = scmp.eq.s32.totalorder %s24, 0
      %p207 = por %p205, %p206
      %p208 = scmp.le.s32.totalorder 1, %s18
      %p209 = scmp.lt.s32.totalorder %s18, 3
      %p210 = pnand %p208, %p209
      %p211 = pneg %p210
      // Predicated region
      $region9: #{tpu_custom_call.1} parent=5 // pred_check
        _
      $region10: #{tpu_custom_call.1} parent=5 // pred_check_branch
        %213 = sbr.rel (%p210) target = $region12
      $region11: #{tpu_custom_call.1} parent=5 // pred_region
        %s214 = ssub.s32 %s18, 1
        // Predicated region
        $region13: #{tpu_custom_call.1} parent=11 // pred_check
          %p215 = pneg %p151
        $region14: #{tpu_custom_call.1} parent=11 // pred_check_branch
          %217 = sbr.rel (%p215) target = $region16
        $region15: #{tpu_custom_call.1} parent=11 // pred_region
          %s219 = ssub.s32 2304, 2304
          %220 = vsyncadd [#allocation6], %s219
          %s221 = sshll.u32 [#allocation5], 4
          %s222 = int_to_ptr.vmem [resolvable:$true] %s221
          %227 = dma.hbm_to_vmem [thread:$0]  %s3, 2304, %s222, [#allocation6], 64, 64, 4
        $region16: #{tpu_custom_call.1} parent=11 // pred_fallthru
          _
        // Predicated region
        $region17: #{tpu_custom_call.1} parent=11 // pred_check
          %p228 = pneg %p172
        $region18: #{tpu_custom_call.1} parent=11 // pred_check_branch
          %230 = sbr.rel (%p228) target = $region20
        $region19: #{tpu_custom_call.1} parent=11 // pred_region
          _
        $region20: #{tpu_custom_call.1} parent=11 // pred_fallthru
          _
      $region12: #{tpu_custom_call.1} parent=5 // pred_fallthru
        _
      %p231 = scmp.lt.s32.totalorder %s18, 2
      // Predicated region
      $region21: #{tpu_custom_call.1} parent=5 // pred_check
        %p232 = pneg %p231
      $region22: #{tpu_custom_call.1} parent=5 // pred_check_branch
        %234 = sbr.rel (%p232) target = $region24
      $region23: #{tpu_custom_call.1} parent=5 // pred_region
        // Predicated region
        $region25: #{tpu_custom_call.1} parent=23 // pred_check
          %p235 = pneg %p52
        $region26: #{tpu_custom_call.1} parent=23 // pred_check_branch
          %237 = sbr.rel (%p235) target = $region28
        $region27: #{tpu_custom_call.1} parent=23 // pred_region
          %p238 = scmp.lt.s32.totalorder %s25, 1
          %s239 = scalar_select %p238, %s25, 1
          %p240 = scmp.lt.s32.totalorder %s26, 0
          %s241 = scalar_select %p240, %s26, 0
          %s242 = smul.addr %s241, 8
          %s243 = smul.addr %s239, 8
          %s244 = sadd.s32 %s242, %s243
          %s245 = smul.addr %s244, 4
          %s246 = scalar_lea.vmem %s0, %s245
        $region28: #{tpu_custom_call.1} parent=23 // pred_fallthru
          _
        // Predicated region
        $region29: #{tpu_custom_call.1} parent=23 // pred_check
          %p247 = pneg %p88
        $region30: #{tpu_custom_call.1} parent=23 // pred_check_branch
          %249 = sbr.rel (%p247) target = $region32
        $region31: #{tpu_custom_call.1} parent=23 // pred_region
          %s250 = smul.u32 %s26, 8
          %s251 = ssub.s32 %s250, 1
          %p252 = scmp.gt.s32.totalorder %s251, 0
          %s253 = scalar_select %p252, %s251, 0
          %p254 = scmp.lt.s32.totalorder %s25, 1
          %s255 = scalar_select %p254, %s25, 1
          %p256 = scmp.lt.s32.totalorder %s253, 7
          %s257 = scalar_select %p256, %s253, 7
          %s258 = smul.addr %s255, 8
          %s259 = sadd.s32 %s257, %s258
          %s260 = smul.addr %s259, 4
          %s261 = scalar_lea.vmem %s1, %s260
          %s262 = smul.u32 %s26, 8
          %s263 = ssub.s32 %s262, 1
          %p264 = scmp.gt.s32.totalorder %s263, 0
          %s265 = scalar_select %p264, %s263, 0
        $region32: #{tpu_custom_call.1} parent=23 // pred_fallthru
          _
        // Predicated region
        $region33: #{tpu_custom_call.1} parent=23 // pred_check
          %p266 = pneg %p124
        $region34: #{tpu_custom_call.1} parent=23 // pred_check_branch
          %268 = sbr.rel (%p266) target = $region36
        $region35: #{tpu_custom_call.1} parent=23 // pred_region
          %s269 = sand.u32 %s114, 1
          %s270 = scalar_lea.sflag [#allocation3], %s269
          %s271 = sand.u32 %s114, 1
          %s272 = smul.addr %s271, 4
          %s273 = scalar_lea.vmem [#allocation2], %s272
          %s274 = smul.u32 %s26, 8
          %s275 = sadd.s32 %s274, 8
          %p276 = scmp.lt.s32.totalorder %s275, 7
          %s277 = scalar_select %p276, %s275, 7
          %s279 = ssub.s32 64, 64
          %280 = vsyncadd %s270, %s279
          %s281 = smul.addr %s25, 8
          %s282 = sadd.s32 %s277, %s281
          %s283 = smul.addr %s282, 64
          %s284 = scalar_lea.hbm %s2, %s283
          %s286 = sshll.u32 %s273, 4
          %s287 = int_to_ptr.vmem [resolvable:$true] %s286
          %289 = dma.hbm_to_vmem [thread:$0]  %s284, 64, %s287, %s270
        $region36: #{tpu_custom_call.1} parent=23 // pred_fallthru
          _
      $region24: #{tpu_custom_call.1} parent=5 // pred_fallthru
        _
      %p290 = scmp.le.s32.totalorder 1, %s18
      %p291 = scmp.lt.s32.totalorder %s18, 3
      %p292 = pnand %p290, %p291
      %p293 = pneg %p292
      // Predicated region
      $region37: #{tpu_custom_call.1} parent=5 // pred_check
        _
      $region38: #{tpu_custom_call.1} parent=5 // pred_check_branch
        %295 = sbr.rel (%p292) target = $region40
      $region39: #{tpu_custom_call.1} parent=5 // pred_region
        %s296 = ssub.s32 %s18, 1
        %s297 = sand.u32 %s117, 1
        %s298 = scalar_lea.sflag [#allocation3], %s297
        %s299 = sand.u32 %s117, 1
        %s300 = smul.addr %s299, 4
        %s301 = scalar_lea.vmem [#allocation2], %s300
        // Predicated region
        $region41: #{tpu_custom_call.1} parent=39 // pred_check
          %p302 = pneg %p130
        $region42: #{tpu_custom_call.1} parent=39 // pred_check_branch
          %304 = sbr.rel (%p302) target = $region44
        $region43: #{tpu_custom_call.1} parent=39 // pred_region
          %305 = dma.done %s298, 64
        $region44: #{tpu_custom_call.1} parent=39 // pred_fallthru
          _
        // Predicated region
        $region45: #{tpu_custom_call.1} parent=39 // pred_check
          %p306 = pneg %p151
        $region46: #{tpu_custom_call.1} parent=39 // pred_check_branch
          %308 = sbr.rel (%p306) target = $region48
        $region47: #{tpu_custom_call.1} parent=39 // pred_region
          %309 = dma.done [#allocation6], 2304
        $region48: #{tpu_custom_call.1} parent=39 // pred_fallthru
          _
        %p310 = scmp.lt.s32.totalorder %s27, 1
        %s311 = scalar_select %p310, %s27, 1
        %p312 = scmp.lt.s32.totalorder %s28, 0
        %s313 = scalar_select %p312, %s28, 0
        %s314 = smul.addr %s313, 8
        %s315 = smul.addr %s311, 8
        %s316 = sadd.s32 %s314, %s315
        %s317 = smul.addr %s316, 4
        %s318 = scalar_lea.vmem %s0, %s317
        %p319 = pneg %p58
        %p320 = pneg %p55
        %s321 = smul.u32 %s28, 8
        %s322 = ssub.s32 %s321, 1
        %p323 = scmp.gt.s32.totalorder %s322, 0
        %s324 = scalar_select %p323, %s322, 0
        %p325 = scmp.lt.s32.totalorder %s27, 1
        %s326 = scalar_select %p325, %s27, 1
        %p327 = scmp.lt.s32.totalorder %s324, 7
        %s328 = scalar_select %p327, %s324, 7
        %s329 = smul.addr %s326, 8
        %s330 = sadd.s32 %s328, %s329
        %s331 = smul.addr %s330, 4
        %s332 = scalar_lea.vmem %s1, %s331
        %p333 = pneg %p94
        %p334 = pneg %p91
        %s335 = sand.u32 %s117, 1
        %s336 = scalar_lea.sflag [#allocation3], %s335
        %s337 = sand.u32 %s117, 1
        %s338 = smul.addr %s337, 4
        %s339 = scalar_lea.vmem [#allocation2], %s338
        %p340 = pneg %p130
        %p341 = pneg %p127
        %p342 = pneg %p151
        %p343 = pneg %p148
        %p344 = pneg %p172
        %p345 = pneg %p169
        %p346 = pneg %p200
        %p347 = pneg %p197
        %s348 = sand.u32 %s187, 1
        %s349 = scalar_lea.sflag [#allocation4], %s348
        %s350 = sand.u32 %s187, 1
        %s351 = smul.addr %s350, 32
        %s352 = scalar_lea.vmem [#allocation7], %s351
        %p353 = scmp.lt.s32.totalorder %s27, 1
        %s354 = scalar_select %p353, %s27, 1
        %p355 = scmp.lt.s32.totalorder %s28, 0
        %s356 = scalar_select %p355, %s28, 0
        %s357 = smul.addr %s356, 8
        %s358 = smul.addr %s354, 8
        %s359 = sadd.s32 %s357, %s358
        %s360 = smul.addr %s359, 4
        %s361 = scalar_lea.vmem %s0, %s360
        %s362 = smul.u32 %s28, 8
        %s363 = ssub.s32 %s362, 1
        %p364 = scmp.gt.s32.totalorder %s363, 0
        %s365 = scalar_select %p364, %s363, 0
        %p366 = scmp.lt.s32.totalorder %s27, 1
        %s367 = scalar_select %p366, %s27, 1
        %p368 = scmp.lt.s32.totalorder %s365, 7
        %s369 = scalar_select %p368, %s365, 7
        %s370 = smul.addr %s367, 8
        %s371 = sadd.s32 %s369, %s370
        %s372 = smul.addr %s371, 4
        %s373 = scalar_lea.vmem %s1, %s372
        %s374 = smul.u32 %s28, 8
        %s375 = ssub.s32 %s374, 1
        %p376 = scmp.gt.s32.totalorder %s375, 0
        %s377 = scalar_select %p376, %s375, 0
        %s378 = smul.u32 %s28, 8
        %s379 = sadd.s32 %s378, 8
        %p380 = scmp.lt.s32.totalorder %s379, 7
        %s381 = scalar_select %p380, %s379, 7
        %p383 = scmp.eq.s32.totalorder %s28, 0
        %s384 = scalar_select %p383, 0.0, 1.0
        %p386 = scmp.ne.f32.partialorder %s384, %s384
        %s387 = sshrl.u32 %s384, 16
        %s388 = sand.u32 %s387, 1
        %s389 = sadd.s32 32767, %s388
        %s390 = sadd.s32 %s384, %s389
        %s391 = sand.u32 %s390, 4294901760
        %s392 = scalar_select %p386, 2143289344, %s391
        %s394 = sshrl.u32 %s392, 16
        %v395 = vld [vmem:[%s361] sm:$0xf]
        %v396 = vld [vmem:[%s361 + $0x4] sm:$0xf]
        %v397 = vld [vmem:[%s361 + $0x8] sm:$0xf]
        %v398 = vld [vmem:[%s361 + $0xc] sm:$0xf]
        %v399 = vld [vmem:[%s361 + $0x10] sm:$0xf]
        %v400 = vld [vmem:[%s361 + $0x14] sm:$0xf]
        %v401 = vld [vmem:[%s361 + $0x18] sm:$0xf]
        %v402 = vld [vmem:[%s361 + $0x1c] sm:$0xf]
        %v403 = vld [vmem:[%s373] sm:$0xf]
        %s404 = sshll.u32 %s394, 16
        %s405 = sor.u32 %s394, %s404
        %v406 = vstv %s405
        %v408 = vmul.bf16 %v403, %v406
        %v409 = vld [vmem:[%s301] sm:$0xf]
        %v410 = vmul.bf16 %v409, %v406
        %v419 = vunpack.c.l.b16 %v395
        %v420 = vunpack.c.l.b16 %v396
        %v421 = vunpack.c.l.b16 %v397
        %v422 = vunpack.c.l.b16 %v398
        %v423 = vunpack.c.l.b16 %v399
        %v424 = vunpack.c.l.b16 %v400
        %v425 = vunpack.c.l.b16 %v401
        %v426 = vunpack.c.l.b16 %v402
        %v427 = vpack.c.b16 %v419, %v419
        %v428 = vpack.c.b16 %v421, %v420
        %v429 = vpack.c.b16 %v423, %v422
        %v430 = vpack.c.b16 %v425, %v424
        %v431 = vpack.c.b16 %v426, %v426
        %v433 = vunpack.c.l.b16 %v410
        %v434 = vpack.c.b16 %v433, %v433
        %vm435 = vcmask 1043456
        %v438 = vsel %vm435, %v408, %v427
        %v441 = vsel %vm435, %v431, %v434
        %v442 = vld [vmem:[#allocation5] sm:$0xf]
        %v443 = vld [vmem:[#allocation5 + $0x4] sm:$0xf]
        %v444 = vld [vmem:[#allocation5 + $0x8] sm:$0xf]
        %v445 = vld [vmem:[#allocation5 + $0xc] sm:$0xf]
        %s446 = scalar_lea.vmem [#allocation5], 48
        %v447 = vld [vmem:[%s446] sm:$0xf]
        %v448 = vld [vmem:[%s446 + $0x4] sm:$0xf]
        %v449 = vld [vmem:[%s446 + $0x8] sm:$0xf]
        %v450 = vld [vmem:[%s446 + $0xc] sm:$0xf]
        %vm453 = vcmask 1043456
        %v454 = vrot.slane %v438, 4
        %v455 = vrot.slane %v428, 4
        %v456 = vsel %vm453, %v454, %v455
        %v457 = vrot.slane %v429, 4
        %v458 = vsel %vm453, %v455, %v457
        %v459 = vrot.slane %v430, 4
        %v460 = vsel %vm453, %v457, %v459
        %v461 = vrot.slane %v441, 4
        %v462 = vsel %vm453, %v459, %v461
        %v467 = vunpack.c.l.b16 %v447
        %v468 = vunpack.c.l.b16 %v448
        %v469 = vunpack.c.l.b16 %v449
        %v470 = vunpack.c.l.b16 %v450
        %v471 = vpack.c.b16 %v468, %v467
        %v472 = vpack.c.b16 %v470, %v469
        %vm475 = vcmask 261120
        %v477 = vsel %vm475, %v456, 0
        %v480 = vsel %vm475, %v458, 0
        %v483 = vsel %vm475, %v460, 0
        %v486 = vsel %vm475, %v462, 0
        %488 = vmatprep.subr.bf16.mxu0 0
        %489 = vmatpush1.bf16.msra.mxu0 %v471
        %490 = vmatprep.subr.bf16.mxu0 0
        %491 = vmatpush1.bf16.msra.mxu0 %v472
        %492 = vmatprep.subr.bf16.mxu0 0
        %493 = vmatpush1.bf16.msra.mxu0 0
        %494 = vmatprep.subr.bf16.mxu0 0
        %495 = vmatpush1.bf16.msra.mxu0 0
        %496 = vmatprep.subr.bf16.mxu0 0
        %497 = vmatpush1.bf16.msra.mxu0 0
        %498 = vmatprep.subr.bf16.mxu0 0
        %499 = vmatpush1.bf16.msra.mxu0 0
        %500 = vmatprep.subr.bf16.mxu0 0
        %501 = vmatpush1.bf16.msra.mxu0 0
        %502 = vmatprep.subr.bf16.mxu0 0
        %503 = vmatpush1.bf16.msra.mxu0 0
        %504 = vmatprep.subr.bf16.mxu0 0
        %505 = vmatpush1.bf16.msra.mxu0 0
        %506 = vmatprep.subr.bf16.mxu0 0
        %507 = vmatpush1.bf16.msra.mxu0 0
        %508 = vmatprep.subr.bf16.mxu0 0
        %509 = vmatpush1.bf16.msra.mxu0 0
        %510 = vmatprep.subr.bf16.mxu0 0
        %511 = vmatpush1.bf16.msra.mxu0 0
        %512 = vmatprep.subr.bf16.mxu0 0
        %513 = vmatpush1.bf16.msra.mxu0 0
        %514 = vmatprep.subr.bf16.mxu0 0
        %515 = vmatpush1.bf16.msra.mxu0 0
        %516 = vmatprep.subr.bf16.mxu0 0
        %517 = vmatpush1.bf16.msra.mxu0 0
        %518 = vmatprep.subr.bf16.mxu0 0
        %519 = vmatpush1.bf16.msra.mxu0 0
        %520 = vmatprep.mubr.bf16.mxu0 0
        %521 = vmatmul.mubr.bf16.gmra.mrb[0].mxu0 %v477
        %v522 = vpop.f32.mrb[0].mxu0
        %v523 = vadd.f32 0.0, %v522
        %v524 = vpop.f32.mrb[0].mxu0
        %v525 = vpop.f32.mrb[0].mxu0
        %v526 = vadd.f32 0.0, %v525
        %v527 = vpop.f32.mrb[0].mxu0
        %528 = vmatprep.mubr.bf16.mxu0 0
        %529 = vmatmul.mubr.bf16.gmra.mrb[0].mxu0 %v480
        %v530 = vpop.f32.mrb[0].mxu0
        %v531 = vadd.f32 0.0, %v530
        %v532 = vpop.f32.mrb[0].mxu0
        %v533 = vpop.f32.mrb[0].mxu0
        %v534 = vadd.f32 0.0, %v533
        %v535 = vpop.f32.mrb[0].mxu0
        %536 = vmatprep.mubr.bf16.mxu0 0
        %537 = vmatmul.mubr.bf16.gmra.mrb[0].mxu0 %v483
        %v538 = vpop.f32.mrb[0].mxu0
        %v539 = vadd.f32 0.0, %v538
        %v540 = vpop.f32.mrb[0].mxu0
        %v541 = vpop.f32.mrb[0].mxu0
        %v542 = vadd.f32 0.0, %v541
        %v543 = vpop.f32.mrb[0].mxu0
        %544 = vmatprep.mubr.bf16.mxu0 0
        %545 = vmatmul.mubr.bf16.gmra.mrb[0].mxu0 %v486
        %v546 = vpop.f32.mrb[0].mxu0
        %v547 = vadd.f32 0.0, %v546
        %v548 = vpop.f32.mrb[0].mxu0
        %v549 = vpop.f32.mrb[0].mxu0
        %v550 = vadd.f32 0.0, %v549
        %v551 = vpop.f32.mrb[0].mxu0
        %552 = vdwg.mxu0
        %v557 = vunpack.c.l.b16 %v442
        %v558 = vunpack.c.l.b16 %v443
        %v559 = vunpack.c.l.b16 %v444
        %v560 = vunpack.c.l.b16 %v445
        %v561 = vpack.c.b16 %v558, %v557
        %v562 = vpack.c.b16 %v560, %v559
        %v565 = vsel %vm475, %v438, 0
        %v568 = vsel %vm475, %v428, 0
        %v571 = vsel %vm475, %v429, 0
        %v574 = vsel %vm475, %v430, 0
        %576 = vmatprep.subr.bf16.mxu0 0
        %577 = vmatpush1.bf16.msra.mxu0 %v561
        %578 = vmatprep.subr.bf16.mxu0 0
        %579 = vmatpush1.bf16.msra.mxu0 %v562
        %580 = vmatprep.subr.bf16.mxu0 0
        %581 = vmatpush1.bf16.msra.mxu0 0
        %582 = vmatprep.subr.bf16.mxu0 0
        %583 = vmatpush1.bf16.msra.mxu0 0
        %584 = vmatprep.subr.bf16.mxu0 0
        %585 = vmatpush1.bf16.msra.mxu0 0
        %586 = vmatprep.subr.bf16.mxu0 0
        %587 = vmatpush1.bf16.msra.mxu0 0
        %588 = vmatprep.subr.bf16.mxu0 0
        %589 = vmatpush1.bf16.msra.mxu0 0
        %590 = vmatprep.subr.bf16.mxu0 0
        %591 = vmatpush1.bf16.msra.mxu0 0
        %592 = vmatprep.subr.bf16.mxu0 0
        %593 = vmatpush1.bf16.msra.mxu0 0
        %594 = vmatprep.subr.bf16.mxu0 0
        %595 = vmatpush1.bf16.msra.mxu0 0
        %596 = vmatprep.subr.bf16.mxu0 0
        %597 = vmatpush1.bf16.msra.mxu0 0
        %598 = vmatprep.subr.bf16.mxu0 0
        %599 = vmatpush1.bf16.msra.mxu0 0
        %600 = vmatprep.subr.bf16.mxu0 0
        %601 = vmatpush1.bf16.msra.mxu0 0
        %602 = vmatprep.subr.bf16.mxu0 0
        %603 = vmatpush1.bf16.msra.mxu0 0
        %604 = vmatprep.subr.bf16.mxu0 0
        %605 = vmatpush1.bf16.msra.mxu0 0
        %606 = vmatprep.subr.bf16.mxu0 0
        %607 = vmatpush1.bf16.msra.mxu0 0
        %608 = vmatprep.mubr.bf16.mxu0 0
        %609 = vmatmul.mubr.bf16.gmra.mrb[0].mxu0 %v565
        %v610 = vpop.f32.mrb[0].mxu0
        %v611 = vadd.f32 %v523, %v610
        %v612 = vpop.f32.mrb[0].mxu0
        %v613 = vpop.f32.mrb[0].mxu0
        %v614 = vadd.f32 %v526, %v613
        %v615 = vpop.f32.mrb[0].mxu0
        %616 = vmatprep.mubr.bf16.mxu0 0
        %617 = vmatmul.mubr.bf16.gmra.mrb[0].mxu0 %v568
        %v618 = vpop.f32.mrb[0].mxu0
        %v619 = vadd.f32 %v531, %v618
        %v620 = vpop.f32.mrb[0].mxu0
        %v621 = vpop.f32.mrb[0].mxu0
        %v622 = vadd.f32 %v534, %v621
        %v623 = vpop.f32.mrb[0].mxu0
        %624 = vmatprep.mubr.bf16.mxu0 0
        %625 = vmatmul.mubr.bf16.gmra.mrb[0].mxu0 %v571
        %v626 = vpop.f32.mrb[0].mxu0
        %v627 = vadd.f32 %v539, %v626
        %v628 = vpop.f32.mrb[0].mxu0
        %v629 = vpop.f32.mrb[0].mxu0
        %v630 = vadd.f32 %v542, %v629
        %v631 = vpop.f32.mrb[0].mxu0
        %632 = vmatprep.mubr.bf16.mxu0 0
        %633 = vmatmul.mubr.bf16.gmra.mrb[0].mxu0 %v574
        %v634 = vpop.f32.mrb[0].mxu0
        %v635 = vadd.f32 %v547, %v634
        %v636 = vpop.f32.mrb[0].mxu0
        %v637 = vpop.f32.mrb[0].mxu0
        %v638 = vadd.f32 %v550, %v637
        %v639 = vpop.f32.mrb[0].mxu0
        %640 = vdwg.mxu0
        %s641 = scalar_lea.vmem [#allocation5], 96
        %v642 = vld [vmem:[%s641] sm:$0xf]
        %v643 = vld [vmem:[%s641 + $0x4] sm:$0xf]
        %v644 = vld [vmem:[%s641 + $0x8] sm:$0xf]
        %v645 = vld [vmem:[%s641 + $0xc] sm:$0xf]
        %v650 = vunpack.c.l.b16 %v642
        %v651 = vunpack.c.l.b16 %v643
        %v652 = vunpack.c.l.b16 %v644
        %v653 = vunpack.c.l.b16 %v645
        %v654 = vpack.c.b16 %v651, %v650
        %v655 = vpack.c.b16 %v653, %v652
        %v658 = vsel %vm475, %v441, 0
        %660 = vmatprep.subr.bf16.mxu0 0
        %661 = vmatpush1.bf16.msra.mxu0 %v654
        %662 = vmatprep.subr.bf16.mxu0 0
        %663 = vmatpush1.bf16.msra.mxu0 %v655
        %664 = vmatprep.subr.bf16.mxu0 0
        %665 = vmatpush1.bf16.msra.mxu0 0
        %666 = vmatprep.subr.bf16.mxu0 0
        %667 = vmatpush1.bf16.msra.mxu0 0
        %668 = vmatprep.subr.bf16.mxu0 0
        %669 = vmatpush1.bf16.msra.mxu0 0
        %670 = vmatprep.subr.bf16.mxu0 0
        %671 = vmatpush1.bf16.msra.mxu0 0
        %672 = vmatprep.subr.bf16.mxu0 0
        %673 = vmatpush1.bf16.msra.mxu0 0
        %674 = vmatprep.subr.bf16.mxu0 0
        %675 = vmatpush1.bf16.msra.mxu0 0
        %676 = vmatprep.subr.bf16.mxu0 0
        %677 = vmatpush1.bf16.msra.mxu0 0
        %678 = vmatprep.subr.bf16.mxu0 0
        %679 = vmatpush1.bf16.msra.mxu0 0
        %680 = vmatprep.subr.bf16.mxu0 0
        %681 = vmatpush1.bf16.msra.mxu0 0
        %682 = vmatprep.subr.bf16.mxu0 0
        %683 = vmatpush1.bf16.msra.mxu0 0
        %684 = vmatprep.subr.bf16.mxu0 0
        %685 = vmatpush1.bf16.msra.mxu0 0
        %686 = vmatprep.subr.bf16.mxu0 0
        %687 = vmatpush1.bf16.msra.mxu0 0
        %688 = vmatprep.subr.bf16.mxu0 0
        %689 = vmatpush1.bf16.msra.mxu0 0
        %690 = vmatprep.subr.bf16.mxu0 0
        %691 = vmatpush1.bf16.msra.mxu0 0
        %692 = vmatprep.mubr.bf16.mxu0 0
        %693 = vmatmul.mubr.bf16.gmra.mrb[0].mxu0 %v568
        %v694 = vpop.f32.mrb[0].mxu0
        %v695 = vadd.f32 0.0, %v694
        %v696 = vpop.f32.mrb[0].mxu0
        %v697 = vpop.f32.mrb[0].mxu0
        %v698 = vadd.f32 0.0, %v697
        %v699 = vpop.f32.mrb[0].mxu0
        %700 = vmatprep.mubr.bf16.mxu0 0
        %701 = vmatmul.mubr.bf16.gmra.mrb[0].mxu0 %v571
        %v702 = vpop.f32.mrb[0].mxu0
        %v703 = vadd.f32 0.0, %v702
        %v704 = vpop.f32.mrb[0].mxu0
        %v705 = vpop.f32.mrb[0].mxu0
        %v706 = vadd.f32 0.0, %v705
        %v707 = vpop.f32.mrb[0].mxu0
        %708 = vmatprep.mubr.bf16.mxu0 0
        %709 = vmatmul.mubr.bf16.gmra.mrb[0].mxu0 %v574
        %v710 = vpop.f32.mrb[0].mxu0
        %v711 = vadd.f32 0.0, %v710
        %v712 = vpop.f32.mrb[0].mxu0
        %v713 = vpop.f32.mrb[0].mxu0
        %v714 = vadd.f32 0.0, %v713
        %v715 = vpop.f32.mrb[0].mxu0
        %716 = vmatprep.mubr.bf16.mxu0 0
        %717 = vmatmul.mubr.bf16.gmra.mrb[0].mxu0 %v658
        %v718 = vpop.f32.mrb[0].mxu0
        %v719 = vadd.f32 0.0, %v718
        %v720 = vpop.f32.mrb[0].mxu0
        %v721 = vpop.f32.mrb[0].mxu0
        %v722 = vadd.f32 0.0, %v721
        %v723 = vpop.f32.mrb[0].mxu0
        %724 = vdwg.mxu0
        %v725 = vadd.f32 %v611, %v695
        %v726 = vadd.f32 %v614, %v698
        %v727 = vadd.f32 %v619, %v703
        %v728 = vadd.f32 %v622, %v706
        %v729 = vadd.f32 %v627, %v711
        %v730 = vadd.f32 %v630, %v714
        %v731 = vadd.f32 %v635, %v719
        %v732 = vadd.f32 %v638, %v722
        %s733 = scalar_lea.vmem [#allocation5], 16
        %v734 = vld [vmem:[%s733] sm:$0xf]
        %v735 = vld [vmem:[%s733 + $0x4] sm:$0xf]
        %v736 = vld [vmem:[%s733 + $0x8] sm:$0xf]
        %v737 = vld [vmem:[%s733 + $0xc] sm:$0xf]
        %s738 = scalar_lea.vmem [#allocation5], 64
        %v739 = vld [vmem:[%s738] sm:$0xf]
        %v740 = vld [vmem:[%s738 + $0x4] sm:$0xf]
        %v741 = vld [vmem:[%s738 + $0x8] sm:$0xf]
        %v742 = vld [vmem:[%s738 + $0xc] sm:$0xf]
        %v747 = vunpack.c.l.b16 %v739
        %v748 = vunpack.c.l.b16 %v740
        %v749 = vunpack.c.l.b16 %v741
        %v750 = vunpack.c.l.b16 %v742
        %v751 = vpack.c.b16 %v748, %v747
        %v752 = vpack.c.b16 %v750, %v749
        %755 = vmatprep.subr.bf16.mxu0 0
        %756 = vmatpush1.bf16.msra.mxu0 %v751
        %757 = vmatprep.subr.bf16.mxu0 0
        %758 = vmatpush1.bf16.msra.mxu0 %v752
        %759 = vmatprep.subr.bf16.mxu0 0
        %760 = vmatpush1.bf16.msra.mxu0 0
        %761 = vmatprep.subr.bf16.mxu0 0
        %762 = vmatpush1.bf16.msra.mxu0 0
        %763 = vmatprep.subr.bf16.mxu0 0
        %764 = vmatpush1.bf16.msra.mxu0 0
        %765 = vmatprep.subr.bf16.mxu0 0
        %766 = vmatpush1.bf16.msra.mxu0 0
        %767 = vmatprep.subr.bf16.mxu0 0
        %768 = vmatpush1.bf16.msra.mxu0 0
        %769 = vmatprep.subr.bf16.mxu0 0
        %770 = vmatpush1.bf16.msra.mxu0 0
        %771 = vmatprep.subr.bf16.mxu0 0
        %772 = vmatpush1.bf16.msra.mxu0 0
        %773 = vmatprep.subr.bf16.mxu0 0
        %774 = vmatpush1.bf16.msra.mxu0 0
        %775 = vmatprep.subr.bf16.mxu0 0
        %776 = vmatpush1.bf16.msra.mxu0 0
        %777 = vmatprep.subr.bf16.mxu0 0
        %778 = vmatpush1.bf16.msra.mxu0 0
        %779 = vmatprep.subr.bf16.mxu0 0
        %780 = vmatpush1.bf16.msra.mxu0 0
        %781 = vmatprep.subr.bf16.mxu0 0
        %782 = vmatpush1.bf16.msra.mxu0 0
        %783 = vmatprep.subr.bf16.mxu0 0
        %784 = vmatpush1.bf16.msra.mxu0 0
        %785 = vmatprep.subr.bf16.mxu0 0
        %786 = vmatpush1.bf16.msra.mxu0 0
        %787 = vmatprep.mubr.bf16.mxu0 0
        %788 = vmatmul.mubr.bf16.gmra.mrb[0].mxu0 %v477
        %v789 = vpop.f32.mrb[0].mxu0
        %v790 = vadd.f32 0.0, %v789
        %v791 = vpop.f32.mrb[0].mxu0
        %v792 = vpop.f32.mrb[0].mxu0
        %v793 = vadd.f32 0.0, %v792
        %v794 = vpop.f32.mrb[0].mxu0
        %795 = vmatprep.mubr.bf16.mxu0 0
        %796 = vmatmul.mubr.bf16.gmra.mrb[0].mxu0 %v480
        %v797 = vpop.f32.mrb[0].mxu0
        %v798 = vadd.f32 0.0, %v797
        %v799 = vpop.f32.mrb[0].mxu0
        %v800 = vpop.f32.mrb[0].mxu0
        %v801 = vadd.f32 0.0, %v800
        %v802 = vpop.f32.mrb[0].mxu0
        %803 = vmatprep.mubr.bf16.mxu0 0
        %804 = vmatmul.mubr.bf16.gmra.mrb[0].mxu0 %v483
        %v805 = vpop.f32.mrb[0].mxu0
        %v806 = vadd.f32 0.0, %v805
        %v807 = vpop.f32.mrb[0].mxu0
        %v808 = vpop.f32.mrb[0].mxu0
        %v809 = vadd.f32 0.0, %v808
        %v810 = vpop.f32.mrb[0].mxu0
        %811 = vmatprep.mubr.bf16.mxu0 0
        %812 = vmatmul.mubr.bf16.gmra.mrb[0].mxu0 %v486
        %v813 = vpop.f32.mrb[0].mxu0
        %v814 = vadd.f32 0.0, %v813
        %v815 = vpop.f32.mrb[0].mxu0
        %v816 = vpop.f32.mrb[0].mxu0
        %v817 = vadd.f32 0.0, %v816
        %v818 = vpop.f32.mrb[0].mxu0
        %819 = vdwg.mxu0
        %v824 = vunpack.c.l.b16 %v734
        %v825 = vunpack.c.l.b16 %v735
        %v826 = vunpack.c.l.b16 %v736
        %v827 = vunpack.c.l.b16 %v737
        %v828 = vpack.c.b16 %v825, %v824
        %v829 = vpack.c.b16 %v827, %v826
        %832 = vmatprep.subr.bf16.mxu0 0
        %833 = vmatpush1.bf16.msra.mxu0 %v828
        %834 = vmatprep.subr.bf16.mxu0 0
        %835 = vmatpush1.bf16.msra.mxu0 %v829
        %836 = vmatprep.subr.bf16.mxu0 0
        %837 = vmatpush1.bf16.msra.mxu0 0
        %838 = vmatprep.subr.bf16.mxu0 0
        %839 = vmatpush1.bf16.msra.mxu0 0
        %840 = vmatprep.subr.bf16.mxu0 0
        %841 = vmatpush1.bf16.msra.mxu0 0
        %842 = vmatprep.subr.bf16.mxu0 0
        %843 = vmatpush1.bf16.msra.mxu0 0
        %844 = vmatprep.subr.bf16.mxu0 0
        %845 = vmatpush1.bf16.msra.mxu0 0
        %846 = vmatprep.subr.bf16.mxu0 0
        %847 = vmatpush1.bf16.msra.mxu0 0
        %848 = vmatprep.subr.bf16.mxu0 0
        %849 = vmatpush1.bf16.msra.mxu0 0
        %850 = vmatprep.subr.bf16.mxu0 0
        %851 = vmatpush1.bf16.msra.mxu0 0
        %852 = vmatprep.subr.bf16.mxu0 0
        %853 = vmatpush1.bf16.msra.mxu0 0
        %854 = vmatprep.subr.bf16.mxu0 0
        %855 = vmatpush1.bf16.msra.mxu0 0
        %856 = vmatprep.subr.bf16.mxu0 0
        %857 = vmatpush1.bf16.msra.mxu0 0
        %858 = vmatprep.subr.bf16.mxu0 0
        %859 = vmatpush1.bf16.msra.mxu0 0
        %860 = vmatprep.subr.bf16.mxu0 0
        %861 = vmatpush1.bf16.msra.mxu0 0
        %862 = vmatprep.subr.bf16.mxu0 0
        %863 = vmatpush1.bf16.msra.mxu0 0
        %864 = vmatprep.mubr.bf16.mxu0 0
        %865 = vmatmul.mubr.bf16.gmra.mrb[0].mxu0 %v565
        %v866 = vpop.f32.mrb[0].mxu0
        %v867 = vadd.f32 %v790, %v866
        %v868 = vpop.f32.mrb[0].mxu0
        %v869 = vpop.f32.mrb[0].mxu0
        %v870 = vadd.f32 %v793, %v869
        %v871 = vpop.f32.mrb[0].mxu0
        %872 = vmatprep.mubr.bf16.mxu0 0
        %873 = vmatmul.mubr.bf16.gmra.mrb[0].mxu0 %v568
        %v874 = vpop.f32.mrb[0].mxu0
        %v875 = vadd.f32 %v798, %v874
        %v876 = vpop.f32.mrb[0].mxu0
        %v877 = vpop.f32.mrb[0].mxu0
        %v878 = vadd.f32 %v801, %v877
        %v879 = vpop.f32.mrb[0].mxu0
        %880 = vmatprep.mubr.bf16.mxu0 0
        %881 = vmatmul.mubr.bf16.gmra.mrb[0].mxu0 %v571
        %v882 = vpop.f32.mrb[0].mxu0
        %v883 = vadd.f32 %v806, %v882
        %v884 = vpop.f32.mrb[0].mxu0
        %v885 = vpop.f32.mrb[0].mxu0
        %v886 = vadd.f32 %v809, %v885
        %v887 = vpop.f32.mrb[0].mxu0
        %888 = vmatprep.mubr.bf16.mxu0 0
        %889 = vmatmul.mubr.bf16.gmra.mrb[0].mxu0 %v574
        %v890 = vpop.f32.mrb[0].mxu0
        %v891 = vadd.f32 %v814, %v890
        %v892 = vpop.f32.mrb[0].mxu0
        %v893 = vpop.f32.mrb[0].mxu0
        %v894 = vadd.f32 %v817, %v893
        %v895 = vpop.f32.mrb[0].mxu0
        %896 = vdwg.mxu0
        %s897 = scalar_lea.vmem [#allocation5], 112
        %v898 = vld [vmem:[%s897] sm:$0xf]
        %v899 = vld [vmem:[%s897 + $0x4] sm:$0xf]
        %v900 = vld [vmem:[%s897 + $0x8] sm:$0xf]
        %v901 = vld [vmem:[%s897 + $0xc] sm:$0xf]
        %v906 = vunpack.c.l.b16 %v898
        %v907 = vunpack.c.l.b16 %v899
        %v908 = vunpack.c.l.b16 %v900
        %v909 = vunpack.c.l.b16 %v901
        %v910 = vpack.c.b16 %v907, %v906
        %v911 = vpack.c.b16 %v909, %v908
        %914 = vmatprep.subr.bf16.mxu0 0
        %915 = vmatpush1.bf16.msra.mxu0 %v910
        %916 = vmatprep.subr.bf16.mxu0 0
        %917 = vmatpush1.bf16.msra.mxu0 %v911
        %918 = vmatprep.subr.bf16.mxu0 0
        %919 = vmatpush1.bf16.msra.mxu0 0
        %920 = vmatprep.subr.bf16.mxu0 0
        %921 = vmatpush1.bf16.msra.mxu0 0
        %922 = vmatprep.subr.bf16.mxu0 0
        %923 = vmatpush1.bf16.msra.mxu0 0
        %924 = vmatprep.subr.bf16.mxu0 0
        %925 = vmatpush1.bf16.msra.mxu0 0
        %926 = vmatprep.subr.bf16.mxu0 0
        %927 = vmatpush1.bf16.msra.mxu0 0
        %928 = vmatprep.subr.bf16.mxu0 0
        %929 = vmatpush1.bf16.msra.mxu0 0
        %930 = vmatprep.subr.bf16.mxu0 0
        %931 = vmatpush1.bf16.msra.mxu0 0
        %932 = vmatprep.subr.bf16.mxu0 0
        %933 = vmatpush1.bf16.msra.mxu0 0
        %934 = vmatprep.subr.bf16.mxu0 0
        %935 = vmatpush1.bf16.msra.mxu0 0
        %936 = vmatprep.subr.bf16.mxu0 0
        %937 = vmatpush1.bf16.msra.mxu0 0
        %938 = vmatprep.subr.bf16.mxu0 0
        %939 = vmatpush1.bf16.msra.mxu0 0
        %940 = vmatprep.subr.bf16.mxu0 0
        %941 = vmatpush1.bf16.msra.mxu0 0
        %942 = vmatprep.subr.bf16.mxu0 0
        %943 = vmatpush1.bf16.msra.mxu0 0
        %944 = vmatprep.subr.bf16.mxu0 0
        %945 = vmatpush1.bf16.msra.mxu0 0
        %946 = vmatprep.mubr.bf16.mxu0 0
        %947 = vmatmul.mubr.bf16.gmra.mrb[0].mxu0 %v568
        %v948 = vpop.f32.mrb[0].mxu0
        %v949 = vadd.f32 0.0, %v948
        %v950 = vpop.f32.mrb[0].mxu0
        %v951 = vpop.f32.mrb[0].mxu0
        %v952 = vadd.f32 0.0, %v951
        %v953 = vpop.f32.mrb[0].mxu0
        %954 = vmatprep.mubr.bf16.mxu0 0
        %955 = vmatmul.mubr.bf16.gmra.mrb[0].mxu0 %v571
        %v956 = vpop.f32.mrb[0].mxu0
        %v957 = vadd.f32 0.0, %v956
        %v958 = vpop.f32.mrb[0].mxu0
        %v959 = vpop.f32.mrb[0].mxu0
        %v960 = vadd.f32 0.0, %v959
        %v961 = vpop.f32.mrb[0].mxu0
        %962 = vmatprep.mubr.bf16.mxu0 0
        %963 = vmatmul.mubr.bf16.gmra.mrb[0].mxu0 %v574
        %v964 = vpop.f32.mrb[0].mxu0
        %v965 = vadd.f32 0.0, %v964
        %v966 = vpop.f32.mrb[0].mxu0
        %v967 = vpop.f32.mrb[0].mxu0
        %v968 = vadd.f32 0.0, %v967
        %v969 = vpop.f32.mrb[0].mxu0
        %970 = vmatprep.mubr.bf16.mxu0 0
        %971 = vmatmul.mubr.bf16.gmra.mrb[0].mxu0 %v658
        %v972 = vpop.f32.mrb[0].mxu0
        %v973 = vadd.f32 0.0, %v972
        %v974 = vpop.f32.mrb[0].mxu0
        %v975 = vpop.f32.mrb[0].mxu0
        %v976 = vadd.f32 0.0, %v975
        %v977 = vpop.f32.mrb[0].mxu0
        %978 = vdwg.mxu0
        %v979 = vadd.f32 %v867, %v949
        %v980 = vadd.f32 %v870, %v952
        %v981 = vadd.f32 %v875, %v957
        %v982 = vadd.f32 %v878, %v960
        %v983 = vadd.f32 %v883, %v965
        %v984 = vadd.f32 %v886, %v968
        %v985 = vadd.f32 %v891, %v973
        %v986 = vadd.f32 %v894, %v976
        %s987 = scalar_lea.vmem [#allocation5], 32
        %v988 = vld [vmem:[%s987] sm:$0xf]
        %v989 = vld [vmem:[%s987 + $0x4] sm:$0xf]
        %v990 = vld [vmem:[%s987 + $0x8] sm:$0xf]
        %v991 = vld [vmem:[%s987 + $0xc] sm:$0xf]
        %s992 = scalar_lea.vmem [#allocation5], 80
        %v993 = vld [vmem:[%s992] sm:$0xf]
        %v994 = vld [vmem:[%s992 + $0x4] sm:$0xf]
        %v995 = vld [vmem:[%s992 + $0x8] sm:$0xf]
        %v996 = vld [vmem:[%s992 + $0xc] sm:$0xf]
        %v1001 = vunpack.c.l.b16 %v993
        %v1002 = vunpack.c.l.b16 %v994
        %v1003 = vunpack.c.l.b16 %v995
        %v1004 = vunpack.c.l.b16 %v996
        %v1005 = vpack.c.b16 %v1002, %v1001
        %v1006 = vpack.c.b16 %v1004, %v1003
        %1009 = vmatprep.subr.bf16.mxu0 0
        %1010 = vmatpush1.bf16.msra.mxu0 %v1005
        %1011 = vmatprep.subr.bf16.mxu0 0
        %1012 = vmatpush1.bf16.msra.mxu0 %v1006
        %1013 = vmatprep.subr.bf16.mxu0 0
        %1014 = vmatpush1.bf16.msra.mxu0 0
        %1015 = vmatprep.subr.bf16.mxu0 0
        %1016 = vmatpush1.bf16.msra.mxu0 0
        %1017 = vmatprep.subr.bf16.mxu0 0
        %1018 = vmatpush1.bf16.msra.mxu0 0
        %1019 = vmatprep.subr.bf16.mxu0 0
        %1020 = vmatpush1.bf16.msra.mxu0 0
        %1021 = vmatprep.subr.bf16.mxu0 0
        %1022 = vmatpush1.bf16.msra.mxu0 0
        %1023 = vmatprep.subr.bf16.mxu0 0
        %1024 = vmatpush1.bf16.msra.mxu0 0
        %1025 = vmatprep.subr.bf16.mxu0 0
        %1026 = vmatpush1.bf16.msra.mxu0 0
        %1027 = vmatprep.subr.bf16.mxu0 0
        %1028 = vmatpush1.bf16.msra.mxu0 0
        %1029 = vmatprep.subr.bf16.mxu0 0
        %1030 = vmatpush1.bf16.msra.mxu0 0
        %1031 = vmatprep.subr.bf16.mxu0 0
        %1032 = vmatpush1.bf16.msra.mxu0 0
        %1033 = vmatprep.subr.bf16.mxu0 0
        %1034 = vmatpush1.bf16.msra.mxu0 0
        %1035 = vmatprep.subr.bf16.mxu0 0
        %1036 = vmatpush1.bf16.msra.mxu0 0
        %1037 = vmatprep.subr.bf16.mxu0 0
        %1038 = vmatpush1.bf16.msra.mxu0 0
        %1039 = vmatprep.subr.bf16.mxu0 0
        %1040 = vmatpush1.bf16.msra.mxu0 0
        %1041 = vmatprep.mubr.bf16.mxu0 0
        %1042 = vmatmul.mubr.bf16.gmra.mrb[0].mxu0 %v477
        %v1043 = vpop.f32.mrb[0].mxu0
        %v1044 = vadd.f32 0.0, %v1043
        %v1045 = vpop.f32.mrb[0].mxu0
        %v1046 = vpop.f32.mrb[0].mxu0
        %v1047 = vadd.f32 0.0, %v1046
        %v1048 = vpop.f32.mrb[0].mxu0
        %1049 = vmatprep.mubr.bf16.mxu0 0
        %1050 = vmatmul.mubr.bf16.gmra.mrb[0].mxu0 %v480
        %v1051 = vpop.f32.mrb[0].mxu0
        %v1052 = vadd.f32 0.0, %v1051
        %v1053 = vpop.f32.mrb[0].mxu0
        %v1054 = vpop.f32.mrb[0].mxu0
        %v1055 = vadd.f32 0.0, %v1054
        %v1056 = vpop.f32.mrb[0].mxu0
        %1057 = vmatprep.mubr.bf16.mxu0 0
        %1058 = vmatmul.mubr.bf16.gmra.mrb[0].mxu0 %v483
        %v1059 = vpop.f32.mrb[0].mxu0
        %v1060 = vadd.f32 0.0, %v1059
        %v1061 = vpop.f32.mrb[0].mxu0
        %v1062 = vpop.f32.mrb[0].mxu0
        %v1063 = vadd.f32 0.0, %v1062
        %v1064 = vpop.f32.mrb[0].mxu0
        %1065 = vmatprep.mubr.bf16.mxu0 0
        %1066 = vmatmul.mubr.bf16.gmra.mrb[0].mxu0 %v486
        %v1067 = vpop.f32.mrb[0].mxu0
        %v1068 = vadd.f32 0.0, %v1067
        %v1069 = vpop.f32.mrb[0].mxu0
        %v1070 = vpop.f32.mrb[0].mxu0
        %v1071 = vadd.f32 0.0, %v1070
        %v1072 = vpop.f32.mrb[0].mxu0
        %1073 = vdwg.mxu0
        %v1078 = vunpack.c.l.b16 %v988
        %v1079 = vunpack.c.l.b16 %v989
        %v1080 = vunpack.c.l.b16 %v990
        %v1081 = vunpack.c.l.b16 %v991
        %v1082 = vpack.c.b16 %v1079, %v1078
        %v1083 = vpack.c.b16 %v1081, %v1080
        %1086 = vmatprep.subr.bf16.mxu0 0
        %1087 = vmatpush1.bf16.msra.mxu0 %v1082
        %1088 = vmatprep.subr.bf16.mxu0 0
        %1089 = vmatpush1.bf16.msra.mxu0 %v1083
        %1090 = vmatprep.subr.bf16.mxu0 0
        %1091 = vmatpush1.bf16.msra.mxu0 0
        %1092 = vmatprep.subr.bf16.mxu0 0
        %1093 = vmatpush1.bf16.msra.mxu0 0
        %1094 = vmatprep.subr.bf16.mxu0 0
        %1095 = vmatpush1.bf16.msra.mxu0 0
        %1096 = vmatprep.subr.bf16.mxu0 0
        %1097 = vmatpush1.bf16.msra.mxu0 0
        %1098 = vmatprep.subr.bf16.mxu0 0
        %1099 = vmatpush1.bf16.msra.mxu0 0
        %1100 = vmatprep.subr.bf16.mxu0 0
        %1101 = vmatpush1.bf16.msra.mxu0 0
        %1102 = vmatprep.subr.bf16.mxu0 0
        %1103 = vmatpush1.bf16.msra.mxu0 0
        %1104 = vmatprep.subr.bf16.mxu0 0
        %1105 = vmatpush1.bf16.msra.mxu0 0
        %1106 = vmatprep.subr.bf16.mxu0 0
        %1107 = vmatpush1.bf16.msra.mxu0 0
        %1108 = vmatprep.subr.bf16.mxu0 0
        %1109 = vmatpush1.bf16.msra.mxu0 0
        %1110 = vmatprep.subr.bf16.mxu0 0
        %1111 = vmatpush1.bf16.msra.mxu0 0
        %1112 = vmatprep.subr.bf16.mxu0 0
        %1113 = vmatpush1.bf16.msra.mxu0 0
        %1114 = vmatprep.subr.bf16.mxu0 0
        %1115 = vmatpush1.bf16.msra.mxu0 0
        %1116 = vmatprep.subr.bf16.mxu0 0
        %1117 = vmatpush1.bf16.msra.mxu0 0
        %1118 = vmatprep.mubr.bf16.mxu0 0
        %1119 = vmatmul.mubr.bf16.gmra.mrb[0].mxu0 %v565
        %v1120 = vpop.f32.mrb[0].mxu0
        %v1121 = vadd.f32 %v1044, %v1120
        %v1122 = vpop.f32.mrb[0].mxu0
        %v1123 = vpop.f32.mrb[0].mxu0
        %v1124 = vadd.f32 %v1047, %v1123
        %v1125 = vpop.f32.mrb[0].mxu0
        %1126 = vmatprep.mubr.bf16.mxu0 0
        %1127 = vmatmul.mubr.bf16.gmra.mrb[0].mxu0 %v568
        %v1128 = vpop.f32.mrb[0].mxu0
        %v1129 = vadd.f32 %v1052, %v1128
        %v1130 = vpop.f32.mrb[0].mxu0
        %v1131 = vpop.f32.mrb[0].mxu0
        %v1132 = vadd.f32 %v1055, %v1131
        %v1133 = vpop.f32.mrb[0].mxu0
        %1134 = vmatprep.mubr.bf16.mxu0 0
        %1135 = vmatmul.mubr.bf16.gmra.mrb[0].mxu0 %v571
        %v1136 = vpop.f32.mrb[0].mxu0
        %v1137 = vadd.f32 %v1060, %v1136
        %v1138 = vpop.f32.mrb[0].mxu0
        %v1139 = vpop.f32.mrb[0].mxu0
        %v1140 = vadd.f32 %v1063, %v1139
        %v1141 = vpop.f32.mrb[0].mxu0
        %1142 = vmatprep.mubr.bf16.mxu0 0
        %1143 = vmatmul.mubr.bf16.gmra.mrb[0].mxu0 %v574
        %v1144 = vpop.f32.mrb[0].mxu0
        %v1145 = vadd.f32 %v1068, %v1144
        %v1146 = vpop.f32.mrb[0].mxu0
        %v1147 = vpop.f32.mrb[0].mxu0
        %v1148 = vadd.f32 %v1071, %v1147
        %v1149 = vpop.f32.mrb[0].mxu0
        %1150 = vdwg.mxu0
        %s1151 = scalar_lea.vmem [#allocation5], 128
        %v1152 = vld [vmem:[%s1151] sm:$0xf]
        %v1153 = vld [vmem:[%s1151 + $0x4] sm:$0xf]
        %v1154 = vld [vmem:[%s1151 + $0x8] sm:$0xf]
        %v1155 = vld [vmem:[%s1151 + $0xc] sm:$0xf]
        %v1160 = vunpack.c.l.b16 %v1152
        %v1161 = vunpack.c.l.b16 %v1153
        %v1162 = vunpack.c.l.b16 %v1154
        %v1163 = vunpack.c.l.b16 %v1155
        %v1164 = vpack.c.b16 %v1161, %v1160
        %v1165 = vpack.c.b16 %v1163, %v1162
        %1168 = vmatprep.subr.bf16.mxu0 0
        %1169 = vmatpush1.bf16.msra.mxu0 %v1164
        %1170 = vmatprep.subr.bf16.mxu0 0
        %1171 = vmatpush1.bf16.msra.mxu0 %v1165
        %1172 = vmatprep.subr.bf16.mxu0 0
        %1173 = vmatpush1.bf16.msra.mxu0 0
        %1174 = vmatprep.subr.bf16.mxu0 0
        %1175 = vmatpush1.bf16.msra.mxu0 0
        %1176 = vmatprep.subr.bf16.mxu0 0
        %1177 = vmatpush1.bf16.msra.mxu0 0
        %1178 = vmatprep.subr.bf16.mxu0 0
        %1179 = vmatpush1.bf16.msra.mxu0 0
        %1180 = vmatprep.subr.bf16.mxu0 0
        %1181 = vmatpush1.bf16.msra.mxu0 0
        %1182 = vmatprep.subr.bf16.mxu0 0
        %1183 = vmatpush1.bf16.msra.mxu0 0
        %1184 = vmatprep.subr.bf16.mxu0 0
        %1185 = vmatpush1.bf16.msra.mxu0 0
        %1186 = vmatprep.subr.bf16.mxu0 0
        %1187 = vmatpush1.bf16.msra.mxu0 0
        %1188 = vmatprep.subr.bf16.mxu0 0
        %1189 = vmatpush1.bf16.msra.mxu0 0
        %1190 = vmatprep.subr.bf16.mxu0 0
        %1191 = vmatpush1.bf16.msra.mxu0 0
        %1192 = vmatprep.subr.bf16.mxu0 0
        %1193 = vmatpush1.bf16.msra.mxu0 0
        %1194 = vmatprep.subr.bf16.mxu0 0
        %1195 = vmatpush1.bf16.msra.mxu0 0
        %1196 = vmatprep.subr.bf16.mxu0 0
        %1197 = vmatpush1.bf16.msra.mxu0 0
        %1198 = vmatprep.subr.bf16.mxu0 0
        %1199 = vmatpush1.bf16.msra.mxu0 0
        %1200 = vmatprep.mubr.bf16.mxu0 0
        %1201 = vmatmul.mubr.bf16.gmra.mrb[0].mxu0 %v568
        %v1202 = vpop.f32.mrb[0].mxu0
        %v1203 = vadd.f32 0.0, %v1202
        %v1204 = vpop.f32.mrb[0].mxu0
        %v1205 = vpop.f32.mrb[0].mxu0
        %v1206 = vadd.f32 0.0, %v1205
        %v1207 = vpop.f32.mrb[0].mxu0
        %1208 = vmatprep.mubr.bf16.mxu0 0
        %1209 = vmatmul.mubr.bf16.gmra.mrb[0].mxu0 %v571
        %v1210 = vpop.f32.mrb[0].mxu0
        %v1211 = vadd.f32 0.0, %v1210
        %v1212 = vpop.f32.mrb[0].mxu0
        %v1213 = vpop.f32.mrb[0].mxu0
        %v1214 = vadd.f32 0.0, %v1213
        %v1215 = vpop.f32.mrb[0].mxu0
        %1216 = vmatprep.mubr.bf16.mxu0 0
        %1217 = vmatmul.mubr.bf16.gmra.mrb[0].mxu0 %v574
        %v1218 = vpop.f32.mrb[0].mxu0
        %v1219 = vadd.f32 0.0, %v1218
        %v1220 = vpop.f32.mrb[0].mxu0
        %v1221 = vpop.f32.mrb[0].mxu0
        %v1222 = vadd.f32 0.0, %v1221
        %v1223 = vpop.f32.mrb[0].mxu0
        %1224 = vmatprep.mubr.bf16.mxu0 0
        %1225 = vmatmul.mubr.bf16.gmra.mrb[0].mxu0 %v658
        %v1226 = vpop.f32.mrb[0].mxu0
        %v1227 = vadd.f32 0.0, %v1226
        %v1228 = vpop.f32.mrb[0].mxu0
        %v1229 = vpop.f32.mrb[0].mxu0
        %v1230 = vadd.f32 0.0, %v1229
        %v1231 = vpop.f32.mrb[0].mxu0
        %1232 = vdwg.mxu0
        %v1233 = vadd.f32 %v1121, %v1203
        %v1234 = vadd.f32 %v1124, %v1206
        %v1235 = vadd.f32 %v1129, %v1211
        %v1236 = vadd.f32 %v1132, %v1214
        %v1237 = vadd.f32 %v1137, %v1219
        %v1238 = vadd.f32 %v1140, %v1222
        %v1239 = vadd.f32 %v1145, %v1227
        %v1240 = vadd.f32 %v1148, %v1230
        %v1241 = vlaneseq
        %v1242 = vshrl.u32 %v1241, 7
        %v1243 = vadd.s32 %v1242, 8
        %v1244 = vadd.s32 %v1242, 16
        %v1245 = vadd.s32 %v1242, 24
        %v1246 = vadd.s32 %v1242, 32
        %v1247 = vadd.s32 %v1242, 40
        %v1248 = vadd.s32 %v1242, 48
        %v1249 = vadd.s32 %v1242, 56
        %vm1250 = vcmp.lt.s32.totalorder %v1242, 0
        %v1251 = vsub.s32 0, %v1242
        %v1252 = vsel %vm1250, %v1251, %v1242
        %v1253 = vshrl.u32 %v1252, 3
        %v1254 = vand.u32 %v1252, 7
        %v1255 = vsub.s32 0, %v1254
        %v1256 = vsel %vm1250, %v1255, %v1254
        %vm1257 = vcmp.lt.s32.totalorder %v1243, 0
        %v1258 = vsub.s32 0, %v1243
        %v1259 = vsel %vm1257, %v1258, %v1243
        %v1260 = vshrl.u32 %v1259, 3
        %v1261 = vand.u32 %v1259, 7
        %v1262 = vsub.s32 0, %v1261
        %v1263 = vsel %vm1257, %v1262, %v1261
        %vm1264 = vcmp.lt.s32.totalorder %v1244, 0
        %v1265 = vsub.s32 0, %v1244
        %v1266 = vsel %vm1264, %v1265, %v1244
        %v1267 = vshrl.u32 %v1266, 3
        %v1268 = vand.u32 %v1266, 7
        %v1269 = vsub.s32 0, %v1268
        %v1270 = vsel %vm1264, %v1269, %v1268
        %vm1271 = vcmp.lt.s32.totalorder %v1245, 0
        %v1272 = vsub.s32 0, %v1245
        %v1273 = vsel %vm1271, %v1272, %v1245
        %v1274 = vshrl.u32 %v1273, 3
        %v1275 = vand.u32 %v1273, 7
        %v1276 = vsub.s32 0, %v1275
        %v1277 = vsel %vm1271, %v1276, %v1275
        %vm1278 = vcmp.lt.s32.totalorder %v1246, 0
        %v1279 = vsub.s32 0, %v1246
        %v1280 = vsel %vm1278, %v1279, %v1246
        %v1281 = vshrl.u32 %v1280, 3
        %v1282 = vand.u32 %v1280, 7
        %v1283 = vsub.s32 0, %v1282
        %v1284 = vsel %vm1278, %v1283, %v1282
        %vm1285 = vcmp.lt.s32.totalorder %v1247, 0
        %v1286 = vsub.s32 0, %v1247
        %v1287 = vsel %vm1285, %v1286, %v1247
        %v1288 = vshrl.u32 %v1287, 3
        %v1289 = vand.u32 %v1287, 7
        %v1290 = vsub.s32 0, %v1289
        %v1291 = vsel %vm1285, %v1290, %v1289
        %vm1292 = vcmp.lt.s32.totalorder %v1248, 0
        %v1293 = vsub.s32 0, %v1248
        %v1294 = vsel %vm1292, %v1293, %v1248
        %v1295 = vshrl.u32 %v1294, 3
        %v1296 = vand.u32 %v1294, 7
        %v1297 = vsub.s32 0, %v1296
        %v1298 = vsel %vm1292, %v1297, %v1296
        %vm1299 = vcmp.lt.s32.totalorder %v1249, 0
        %v1300 = vsub.s32 0, %v1249
        %v1301 = vsel %vm1299, %v1300, %v1249
        %v1302 = vshrl.u32 %v1301, 3
        %v1303 = vand.u32 %v1301, 7
        %v1304 = vsub.s32 0, %v1303
        %v1305 = vsel %vm1299, %v1304, %v1303
        %vm1306 = vcmp.ne.s32.totalorder %v1256, 0
        %vm1307 = vcmp.ne.s32.totalorder %v1263, 0
        %vm1308 = vcmp.ne.s32.totalorder %v1270, 0
        %vm1309 = vcmp.ne.s32.totalorder %v1277, 0
        %vm1310 = vcmp.ne.s32.totalorder %v1284, 0
        %vm1311 = vcmp.ne.s32.totalorder %v1291, 0
        %vm1312 = vcmp.ne.s32.totalorder %v1298, 0
        %vm1313 = vcmp.ne.s32.totalorder %v1305, 0
        %vm1314 = vcmp.lt.s32.totalorder %v1256, 0
        %vm1315 = vcmp.lt.s32.totalorder %v1263, 0
        %vm1316 = vcmp.lt.s32.totalorder %v1270, 0
        %vm1317 = vcmp.lt.s32.totalorder %v1277, 0
        %vm1318 = vcmp.lt.s32.totalorder %v1284, 0
        %vm1319 = vcmp.lt.s32.totalorder %v1291, 0
        %vm1320 = vcmp.lt.s32.totalorder %v1298, 0
        %vm1321 = vcmp.lt.s32.totalorder %v1305, 0
        %vm1322 = vmand %vm1314, %vm1306
        %vm1323 = vmand %vm1315, %vm1307
        %vm1324 = vmand %vm1316, %vm1308
        %vm1325 = vmand %vm1317, %vm1309
        %vm1326 = vmand %vm1318, %vm1310
        %vm1327 = vmand %vm1319, %vm1311
        %vm1328 = vmand %vm1320, %vm1312
        %vm1329 = vmand %vm1321, %vm1313
        %v1330 = vadd.s32 %v1256, 8
        %v1331 = vadd.s32 %v1263, 8
        %v1332 = vadd.s32 %v1270, 8
        %v1333 = vadd.s32 %v1277, 8
        %v1334 = vadd.s32 %v1284, 8
        %v1335 = vadd.s32 %v1291, 8
        %v1336 = vadd.s32 %v1298, 8
        %v1337 = vadd.s32 %v1305, 8
        %v1338 = vsel %vm1322, %v1330, %v1256
        %v1339 = vsel %vm1323, %v1331, %v1263
        %v1340 = vsel %vm1324, %v1332, %v1270
        %v1341 = vsel %vm1325, %v1333, %v1277
        %v1342 = vsel %vm1326, %v1334, %v1284
        %v1343 = vsel %vm1327, %v1335, %v1291
        %v1344 = vsel %vm1328, %v1336, %v1298
        %v1345 = vsel %vm1329, %v1337, %v1305
        %vm1346 = vcmp.ge.s32.totalorder %v1338, 1
        %vm1347 = vcmp.ge.s32.totalorder %v1339, 1
        %vm1348 = vcmp.ge.s32.totalorder %v1340, 1
        %vm1349 = vcmp.ge.s32.totalorder %v1341, 1
        %vm1350 = vcmp.ge.s32.totalorder %v1342, 1
        %vm1351 = vcmp.ge.s32.totalorder %v1343, 1
        %vm1352 = vcmp.ge.s32.totalorder %v1344, 1
        %vm1353 = vcmp.ge.s32.totalorder %v1345, 1
        %v1354 = vrot.slane %v725, 7
        %v1355 = vrot.slane %v726, 7
        %v1356 = vrot.slane %v727, 7
        %v1357 = vrot.slane %v728, 7
        %v1358 = vrot.slane %v729, 7
        %v1359 = vrot.slane %v730, 7
        %v1360 = vrot.slane %v731, 7
        %v1361 = vrot.slane %v732, 7
        %vm1362 = vcmp.lt.s32.totalorder %v1242, 1
        %v1363 = vsel %vm1362, %v1360, %v1361
        %v1364 = vsel %vm1362, %v1359, %v1360
        %v1365 = vsel %vm1362, %v1358, %v1359
        %v1366 = vsel %vm1362, %v1357, %v1358
        %v1367 = vsel %vm1362, %v1356, %v1357
        %v1368 = vsel %vm1362, %v1355, %v1356
        %v1369 = vsel %vm1362, %v1354, %v1355
        %v1370 = vsel %vm1362, %v1361, %v1354
        %v1371 = vsel %vm1346, 1, 0
        %v1372 = vsel %vm1347, 1, 0
        %v1373 = vsel %vm1348, 1, 0
        %v1374 = vsel %vm1349, 1, 0
        %v1375 = vsel %vm1350, 1, 0
        %v1376 = vsel %vm1351, 1, 0
        %v1377 = vsel %vm1352, 1, 0
        %v1378 = vsel %vm1353, 1, 0
        %vm1379 = vcmp.eq.s32.totalorder %v1371, 1
        %vm1380 = vcmp.eq.s32.totalorder %v1372, 1
        %vm1381 = vcmp.eq.s32.totalorder %v1373, 1
        %vm1382 = vcmp.eq.s32.totalorder %v1374, 1
        %vm1383 = vcmp.eq.s32.totalorder %v1375, 1
        %vm1384 = vcmp.eq.s32.totalorder %v1376, 1
        %vm1385 = vcmp.eq.s32.totalorder %v1377, 1
        %vm1386 = vcmp.eq.s32.totalorder %v1378, 1
        %v1387 = vsel %vm1379, %v1370, 0.0
        %v1388 = vsel %vm1380, %v1369, 0.0
        %v1389 = vsel %vm1381, %v1368, 0.0
        %v1390 = vsel %vm1382, %v1367, 0.0
        %v1391 = vsel %vm1383, %v1366, 0.0
        %v1392 = vsel %vm1384, %v1365, 0.0
        %v1393 = vsel %vm1385, %v1364, 0.0
        %v1394 = vsel %vm1386, %v1363, 0.0
        %v1395 = vadd.f32 %v979, %v1387
        %v1396 = vadd.f32 %v980, %v1388
        %v1397 = vadd.f32 %v981, %v1389
        %v1398 = vadd.f32 %v982, %v1390
        %v1399 = vadd.f32 %v983, %v1391
        %v1400 = vadd.f32 %v984, %v1392
        %v1401 = vadd.f32 %v985, %v1393
        %v1402 = vadd.f32 %v986, %v1394
        %vm1403 = vcmp.le.s32.totalorder %v1338, 6
        %vm1404 = vcmp.le.s32.totalorder %v1339, 6
        %vm1405 = vcmp.le.s32.totalorder %v1340, 6
        %vm1406 = vcmp.le.s32.totalorder %v1341, 6
        %vm1407 = vcmp.le.s32.totalorder %v1342, 6
        %vm1408 = vcmp.le.s32.totalorder %v1343, 6
        %vm1409 = vcmp.le.s32.totalorder %v1344, 6
        %vm1410 = vcmp.le.s32.totalorder %v1345, 6
        %v1411 = vrot.slane %v1233, 1
        %v1412 = vrot.slane %v1234, 1
        %v1413 = vrot.slane %v1235, 1
        %v1414 = vrot.slane %v1236, 1
        %v1415 = vrot.slane %v1237, 1
        %v1416 = vrot.slane %v1238, 1
        %v1417 = vrot.slane %v1239, 1
        %v1418 = vrot.slane %v1240, 1
        %vm1419 = vcmp.lt.s32.totalorder %v1242, 7
        %v1420 = vsel %vm1419, %v1417, %v1418
        %v1421 = vsel %vm1419, %v1416, %v1417
        %v1422 = vsel %vm1419, %v1415, %v1416
        %v1423 = vsel %vm1419, %v1414, %v1415
        %v1424 = vsel %vm1419, %v1413, %v1414
        %v1425 = vsel %vm1419, %v1412, %v1413
        %v1426 = vsel %vm1419, %v1411, %v1412
        %v1427 = vsel %vm1419, %v1418, %v1411
        %v1428 = vsel %vm1403, 1, 0
        %v1429 = vsel %vm1404, 1, 0
        %v1430 = vsel %vm1405, 1, 0
        %v1431 = vsel %vm1406, 1, 0
        %v1432 = vsel %vm1407, 1, 0
        %v1433 = vsel %vm1408, 1, 0
        %v1434 = vsel %vm1409, 1, 0
        %v1435 = vsel %vm1410, 1, 0
        %vm1436 = vcmp.eq.s32.totalorder %v1428, 1
        %vm1437 = vcmp.eq.s32.totalorder %v1429, 1
        %vm1438 = vcmp.eq.s32.totalorder %v1430, 1
        %vm1439 = vcmp.eq.s32.totalorder %v1431, 1
        %vm1440 = vcmp.eq.s32.totalorder %v1432, 1
        %vm1441 = vcmp.eq.s32.totalorder %v1433, 1
        %vm1442 = vcmp.eq.s32.totalorder %v1434, 1
        %vm1443 = vcmp.eq.s32.totalorder %v1435, 1
        %v1444 = vsel %vm1436, %v1426, 0.0
        %v1445 = vsel %vm1437, %v1425, 0.0
        %v1446 = vsel %vm1438, %v1424, 0.0
        %v1447 = vsel %vm1439, %v1423, 0.0
        %v1448 = vsel %vm1440, %v1422, 0.0
        %v1449 = vsel %vm1441, %v1421, 0.0
        %v1450 = vsel %vm1442, %v1420, 0.0
        %v1451 = vsel %vm1443, %v1427, 0.0
        %v1452 = vadd.f32 %v1395, %v1444
        %v1453 = vadd.f32 %v1396, %v1445
        %v1454 = vadd.f32 %v1397, %v1446
        %v1455 = vadd.f32 %v1398, %v1447
        %v1456 = vadd.f32 %v1399, %v1448
        %v1457 = vadd.f32 %v1400, %v1449
        %v1458 = vadd.f32 %v1401, %v1450
        %v1459 = vadd.f32 %v1402, %v1451
        %v1460 = vld [vmem:[%s4] sm:$0x1]
        %v1462 = vlaneseq
        %v1463 = vshrl.u32 %v1462, 7
        %v1464 = vsub.s32 0, %v1463
        %v1465 = vrot.slane %v1460, %v1464
        %v1467 = vadd.f32 %v1452, %v1465
        %v1468 = vadd.f32 %v1453, %v1465
        %v1469 = vadd.f32 %v1454, %v1465
        %v1470 = vadd.f32 %v1455, %v1465
        %v1471 = vadd.f32 %v1456, %v1465
        %v1472 = vadd.f32 %v1457, %v1465
        %v1473 = vadd.f32 %v1458, %v1465
        %v1474 = vadd.f32 %v1459, %v1465
        %v1475 = vmax.f32 %v1467, 0.0
        %v1476 = vmax.f32 %v1468, 0.0
        %v1477 = vmax.f32 %v1469, 0.0
        %v1478 = vmax.f32 %v1470, 0.0
        %v1479 = vmax.f32 %v1471, 0.0
        %v1480 = vmax.f32 %v1472, 0.0
        %v1481 = vmax.f32 %v1473, 0.0
        %v1482 = vmax.f32 %v1474, 0.0
        %v1483 = vpack.c.bf16 %v1476, %v1475
        %v1484 = vpack.c.bf16 %v1478, %v1477
        %v1485 = vpack.c.bf16 %v1480, %v1479
        %v1486 = vpack.c.bf16 %v1482, %v1481
        %v1491 = vunpack.c.l.b16 %v1483
        %v1492 = vunpack.c.h.b16 %v1483
        %v1493 = vunpack.c.l.b16 %v1484
        %v1494 = vunpack.c.h.b16 %v1484
        %v1495 = vunpack.c.l.b16 %v1485
        %v1496 = vunpack.c.h.b16 %v1485
        %v1497 = vunpack.c.l.b16 %v1486
        %v1498 = vunpack.c.h.b16 %v1486
        %v1499 = vpack.c.b16 %v1491, %v1491
        %v1500 = vpack.c.b16 %v1492, %v1492
        %v1501 = vpack.c.b16 %v1493, %v1493
        %v1502 = vpack.c.b16 %v1494, %v1494
        %v1503 = vpack.c.b16 %v1495, %v1495
        %v1504 = vpack.c.b16 %v1496, %v1496
        %v1505 = vpack.c.b16 %v1497, %v1497
        %v1506 = vpack.c.b16 %v1498, %v1498
        %vm1515 = vcmask 519168
        %1516 = vst.msk [vmem:[%s352] sm:$0xf] %vm1515, %v1499
        %1517 = vst.msk [vmem:[%s352 + $0x4] sm:$0xf] %vm1515, %v1500
        %1518 = vst.msk [vmem:[%s352 + $0x8] sm:$0xf] %vm1515, %v1501
        %1519 = vst.msk [vmem:[%s352 + $0xc] sm:$0xf] %vm1515, %v1502
        %1520 = vst.msk [vmem:[%s352 + $0x10] sm:$0xf] %vm1515, %v1503
        %1521 = vst.msk [vmem:[%s352 + $0x14] sm:$0xf] %vm1515, %v1504
        %1522 = vst.msk [vmem:[%s352 + $0x18] sm:$0xf] %vm1515, %v1505
        %1523 = vst.msk [vmem:[%s352 + $0x1c] sm:$0xf] %vm1515, %v1506
        %s1524 = sand.u32 %s187, 1
        %s1525 = scalar_lea.sflag [#allocation4], %s1524
        %s1526 = sand.u32 %s187, 1
        %s1527 = smul.addr %s1526, 32
        %s1528 = scalar_lea.vmem [#allocation7], %s1527
        // Predicated region
        $region49: #{tpu_custom_call.1} parent=39 // pred_check
          %p1529 = pneg %p197
        $region50: #{tpu_custom_call.1} parent=39 // pred_check_branch
          %1531 = sbr.rel (%p1529) target = $region52
        $region51: #{tpu_custom_call.1} parent=39 // pred_region
          %s1533 = ssub.s32 512, 512
          %1534 = vsyncadd %s1525, %s1533
          %s1535 = smul.addr %s28, 8
          %s1536 = smul.addr %s27, 8
          %s1537 = sadd.s32 %s1535, %s1536
          %s1538 = smul.addr %s1537, 64
          %s1539 = scalar_lea.hbm %s5, %s1538
          %s1540 = sshll.u32 %s1528, 4
          %s1541 = int_to_ptr.vmem [resolvable:$true] %s1540
          %1546 = dma.vmem_to_hbm [thread:$0]  %s1541, 512, %s1539, %s1525, 64, 64, 4
        $region52: #{tpu_custom_call.1} parent=39 // pred_fallthru
          _
      $region40: #{tpu_custom_call.1} parent=5 // pred_fallthru
        _
      %p1547 = scmp.le.s32.totalorder 2, %s18
      // Predicated region
      $region53: #{tpu_custom_call.1} parent=5 // pred_check
        %p1548 = pneg %p1547
      $region54: #{tpu_custom_call.1} parent=5 // pred_check_branch
        %1550 = sbr.rel (%p1548) target = $region56
      $region55: #{tpu_custom_call.1} parent=5 // pred_region
        %s1551 = ssub.s32 %s18, 2
        // Predicated region
        $region57: #{tpu_custom_call.1} parent=55 // pred_check
          %p1552 = pneg %p203
        $region58: #{tpu_custom_call.1} parent=55 // pred_check_branch
          %1554 = sbr.rel (%p1552) target = $region60
        $region59: #{tpu_custom_call.1} parent=55 // pred_region
          %s1555 = sand.u32 %s188, 1
          %s1556 = scalar_lea.sflag [#allocation4], %s1555
          %s1557 = sand.u32 %s188, 1
          %s1558 = smul.addr %s1557, 32
          %s1559 = scalar_lea.vmem [#allocation7], %s1558
          %1560 = dma.done %s1556, 512
        $region60: #{tpu_custom_call.1} parent=55 // pred_fallthru
          _
      $region56: #{tpu_custom_call.1} parent=5 // pred_fallthru
        _
    $region6: #{tpu_custom_call.1} parent=1 // loop_footer
      %s22 = sadd.s32 1, %s18
    $region7: #{tpu_custom_call.1} parent=1 // loop_footer_branch
      %17 = sbr.rel target = $region3
    $region8: #{tpu_custom_call.1} parent=1 // loop_exit
      _
    %1561 = vsyncpa [#allocation3], 1
    %s1562 = scalar_lea.sflag [#allocation3], 1
    %1563 = vsyncpa %s1562, 1
    %1564 = vsyncpa [#allocation6], 1
    %1565 = vsyncpa [#allocation4], 1
    %s1566 = scalar_lea.sflag [#allocation4], 1
    %1567 = vsyncpa %s1566, 1

</llo_original>
